<compile_context>
chip_gen: v5e
topology: v5e:2x2
jax: 0.10.0
libtpu: 0.0.40
codegen_flags: <defaults>
</compile_context>

<pallas_src>
import jax
import jax.numpy as jnp
from jax.experimental import pallas as pl
from jax.experimental.pallas import tpu as pltpu

SPLINTER_MAX_QUESTIONS = 20
LN_EPS = 1e-5
Q_PAD = 24  # 20 question slots padded to a multiple of 8 sublanes


def qass_kernel(h_ref, hb_ref, x_ref, w2_ref, b2_ref, out_ref):
    # Sequence path (start_transform) on this (TS, D) tile.
    x = x_ref[0].astype(jnp.bfloat16)                                  # (TS, D)
    s = jnp.dot(x, w2_ref[...], preferred_element_type=jnp.float32)
    s = s + b2_ref[...]                                                # (1, D) bcast
    # tanh GELU -> transcendental lands on the EUP slot (VALU was the
    # binding unit with the exact-erf lowering).
    s = jax.nn.gelu(s, approximate=True)
    # LayerNorm WITHOUT affine: gamma2/beta2 are folded into h_g / h_b.
    mu = jnp.mean(s, axis=-1, keepdims=True)
    var = jnp.mean(jnp.square(s - mu), axis=-1, keepdims=True)
    s = (s - mu) * jax.lax.rsqrt(var + LN_EPS)
    # ans_logits tile (Q_PAD, TS): contract on the shared D axis (flash-attn
    # style), no explicit transpose of s.
    logits = jax.lax.dot_general(
        h_ref[0], s.astype(jnp.bfloat16),
        dimension_numbers=(((1,), (1,)), ((), ())),
        preferred_element_type=jnp.float32)
    out_ref[0] = logits + hb_ref[0]                                    # (Q_PAD, 1) bcast


def _call_qass_kernel(h_g, h_b, x_in, w2, b2, *, B, TS, D, num_s, S_pad,
                      vmem_limit, single_buffer_weights):
    if single_buffer_weights:
        # Grid-invariant operands: single buffer (fetched once) to halve their
        # VMEM footprint (matters most on v7x's 64 MiB VMEM / v5e defaults).
        w2_spec = pl.BlockSpec((D, D), lambda b, t: (0, 0),
                               pipeline_mode=pl.Buffered(1))
        b2_spec = pl.BlockSpec((1, D), lambda b, t: (0, 0),
                               pipeline_mode=pl.Buffered(1))
    else:
        w2_spec = pl.BlockSpec((D, D), lambda b, t: (0, 0))
        b2_spec = pl.BlockSpec((1, D), lambda b, t: (0, 0))

    return pl.pallas_call(
        qass_kernel,
        out_shape=jax.ShapeDtypeStruct((B, Q_PAD, S_pad), jnp.float32),
        grid=(B, num_s),
        in_specs=[
            pl.BlockSpec((1, Q_PAD, D), lambda b, t: (b, 0, 0)),   # h_g (pre-scaled)
            pl.BlockSpec((1, Q_PAD, 1), lambda b, t: (b, 0, 0)),   # h_b (= h @ beta2)
            pl.BlockSpec((1, TS, D), lambda b, t: (b, t, 0)),      # inputs tile
            w2_spec,                                               # W2^T (bf16)
            b2_spec,                                               # b2   (f32)
        ],
        out_specs=pl.BlockSpec((1, Q_PAD, TS), lambda b, t: (b, 0, t)),
        compiler_params=pltpu.CompilerParams(
            dimension_semantics=("parallel", "parallel"),
            vmem_limit_bytes=vmem_limit),
    )(h_g, h_b, x_in, w2, b2)


def qass_forward(params, inputs, positions):
    """Pallas implementation of QuestionAwareTokenSelectionHead.forward."""
    B, S, D = inputs.shape
    Q = SPLINTER_MAX_QUESTIONS

    # ---- Question path (tiny) in plain XLA: gather -> FC/GELU/LN -> classifier.
    pos = positions[:, :Q]
    gathered = jnp.take_along_axis(inputs, pos[:, :, None], axis=1)    # (B, Q, D)
    q = gathered.astype(jnp.float32) @ params["w1"].T + params["b1"]
    q = jax.nn.gelu(q, approximate=False)
    mu = q.mean(-1, keepdims=True)
    var = jnp.square(q - mu).mean(-1, keepdims=True)
    q = (q - mu) * jax.lax.rsqrt(var + LN_EPS) * params["g1"] + params["be1"]
    h = q @ params["wc"].T                                             # (B, Q, D) f32

    # Fold the sequence-path LN affine into the logits contraction.
    h_g = (h * params["g2"]).astype(jnp.bfloat16)                      # (B, Q, D)
    h_b = (h @ params["be2"]).astype(jnp.float32)[..., None]           # (B, Q, 1)
    h_g = jnp.pad(h_g, ((0, 0), (0, Q_PAD - Q), (0, 0)))               # (B, Q_PAD, D)
    h_b = jnp.pad(h_b, ((0, 0), (0, Q_PAD - Q), (0, 0)))               # (B, Q_PAD, 1)

    # ---- Sequence-path kernel operands.
    w2 = params["w2"].T.astype(jnp.bfloat16)                           # (D, D)
    b2 = params["b2"].astype(jnp.float32).reshape(1, D)                # (1, D)

    # Sequence tile size: as large as a ~36 MiB working-set budget allows
    # (double-buffered input tile + single-buffered W2), capped at 2048 rows,
    # multiple of 128 for lane-dense output stores.
    in_bytes = int(inputs.dtype.itemsize)
    weight_bytes = 2 * D * D
    tile_budget = max(2 * 128 * D * in_bytes, 36 * 2 ** 20 - weight_bytes)
    TS_cap = int(max(128, min(2048, (tile_budget // (2 * in_bytes * D)) // 128 * 128)))

    if S % 128 == 0:
        # Common case: pick the largest TS (<= cap, multiple of 128) dividing S
        # -> no input padding/cast pass over HBM, fully in-bounds blocks.
        TS = 128
        t = min(TS_cap, S)
        while t >= 128:
            if S % t == 0:
                TS = t
                break
            t -= 128
        x_in, S_pad = inputs, S
    elif S % 8 == 0 and S <= TS_cap:
        # Short sequences: a single exact tile (output last dim == full dim).
        TS = S
        x_in, S_pad = inputs, S
    else:
        # TODO(synk): mask the ragged tail in-kernel instead of this pad+cast copy.
        TS = min(TS_cap, ((S + 127) // 128) * 128)
        S_pad = ((S + TS - 1) // TS) * TS
        x_in = jnp.pad(inputs, ((0, 0), (0, S_pad - S), (0, 0))).astype(jnp.bfloat16)
    num_s = S_pad // TS

    # VMEM footprint -> scoped limit (cap 48 MiB: v7x has 64 MiB physical/TC).
    fp = (2 * TS * D * int(x_in.dtype.itemsize)        # double-buffered input tile
          + 2 * Q_PAD * TS * 4                         # double-buffered output tile
          + weight_bytes                               # W2 (single-buffered)
          + 2 * (Q_PAD * D * 2 + Q_PAD * 128 * 4)      # h_g / h_b
          + 8 * D * 4)                                 # b2 slab
    vmem_limit = int(min(48 * 2 ** 20, max(16 * 2 ** 20, fp + 8 * 2 ** 20)))

    kwargs = dict(B=B, TS=TS, D=D, num_s=num_s, S_pad=S_pad, vmem_limit=vmem_limit)
    try:
        out = _call_qass_kernel(h_g, h_b, x_in, w2, b2,
                                single_buffer_weights=True, **kwargs)
        out = jax.block_until_ready(out)
    except Exception:
        # pl.Buffered(1) not supported on this jax version -> default buffering.
        out = _call_qass_kernel(h_g, h_b, x_in, w2, b2,
                                single_buffer_weights=False, **kwargs)

    # Strip Q / S padding.
    return out[:, :Q, :S]


def qass_reference(params, inputs, positions):
    """Pure-JAX f32 reference mirroring the PyTorch forward exactly."""
    pos = positions[:, :SPLINTER_MAX_QUESTIONS]
    gathered = jnp.take_along_axis(inputs, pos[:, :, None], axis=1)

    def fc(x, w, b, g, bt):
        h = x @ w.T + b
        h = jax.nn.gelu(h, approximate=False)
        mu = h.mean(-1, keepdims=True)
        var = ((h - mu) ** 2).mean(-1, keepdims=True)
        return (h - mu) / jnp.sqrt(var + LN_EPS) * g + bt

    q = fc(gathered, params["w1"], params["b1"], params["g1"], params["be1"])
    s = fc(inputs, params["w2"], params["b2"], params["g2"], params["be2"])
    h = q @ params["wc"].T
    return jnp.einsum("bqd,bsd->bqs", h, s)


if __name__ == "__main__":
    B, S, D = 2, 128, 32         # batch, sequence length, hidden size
    Q_ALL = 24                   # positions are truncated to SPLINTER_MAX_QUESTIONS

    key = jax.random.PRNGKey(0)
    keys = jax.random.split(key, 12)

    inputs = jax.random.normal(keys[0], (B, S, D), dtype=jnp.float32)
    positions = jax.random.randint(keys[1], (B, Q_ALL), 0, S, dtype=jnp.int32)

    # Deterministic synthetic parameters (shapes from the module's __init__).
    params = {
        "w1": 0.05 * jax.random.normal(keys[2], (D, D), jnp.float32),   # query_start_transform.dense
        "b1": 0.05 * jax.random.normal(keys[3], (D,), jnp.float32),
        "g1": jnp.ones((D,), jnp.float32) + 0.05 * jax.random.normal(keys[4], (D,), jnp.float32),
        "be1": 0.05 * jax.random.normal(keys[5], (D,), jnp.float32),
        "w2": 0.05 * jax.random.normal(keys[6], (D, D), jnp.float32),   # start_transform.dense
        "b2": 0.05 * jax.random.normal(keys[7], (D,), jnp.float32),
        "g2": jnp.ones((D,), jnp.float32) + 0.05 * jax.random.normal(keys[8], (D,), jnp.float32),
        "be2": 0.05 * jax.random.normal(keys[9], (D,), jnp.float32),
        "wc": 0.05 * jax.random.normal(keys[10], (D, D), jnp.float32),  # start_classifier (no bias)
    }

    out = qass_forward(params, inputs, positions)
    out = jax.block_until_ready(out)

    ref = qass_reference(params, inputs, positions)
    assert out.shape == (B, SPLINTER_MAX_QUESTIONS, S), out.shape
    # bf16 MXU operands (f32 accumulation) + tanh GELU vs f32/erf reference:
    # documented 3e-2 tolerance.
    assert jnp.allclose(out, ref, rtol=3e-2, atol=3e-2), float(jnp.max(jnp.abs(out - ref)))

    print("KERNEL_OK")
</pallas_src>

<mosaic_0001>
module attributes {stable_mosaic.version = 11 : i64} {
  func.func @qass_kernel(%arg0: i32, %arg1: i32, %arg2: memref<1x24x32xbf16, #tpu.memory_space<vmem>>, %arg3: memref<1x24x1xf32, #tpu.memory_space<vmem>>, %arg4: memref<1x128x32xf32, #tpu.memory_space<vmem>>, %arg5: memref<32x32xbf16, #tpu.memory_space<vmem>>, %arg6: memref<1x32xf32, #tpu.memory_space<vmem>>, %arg7: memref<1x24x128xf32, #tpu.memory_space<vmem>>) attributes {dimension_semantics = [#tpu.dimension_semantics<parallel>, #tpu.dimension_semantics<parallel>], iteration_bounds = array<i64: 2, 1>, scalar_prefetch = 0 : i64, scratch_operands = 0 : i64, tpu.core_type = #tpu.core_type<tc>, window_params = [{transform_indices = @transform_0, window_bounds = array<i64: 1, 24, 32>}, {transform_indices = @transform_1, window_bounds = array<i64: 1, 24, 1>}, {transform_indices = @transform_2, window_bounds = array<i64: 1, 128, 32>}, {pipeline_mode = #tpu.pipeline_mode<synchronous>, transform_indices = @transform_3, window_bounds = array<i64: 32, 32>}, {pipeline_mode = #tpu.pipeline_mode<synchronous>, transform_indices = @transform_4, window_bounds = array<i64: 1, 32>}, {transform_indices = @transform_5, window_bounds = array<i64: 1, 24, 128>}]} {
    %c0 = arith.constant 0 : index
    %c0_0 = arith.constant 0 : index
    %c0_1 = arith.constant 0 : index
    %0 = vector.load %arg4[%c0, %c0_0, %c0_1] : memref<1x128x32xf32, #tpu.memory_space<vmem>>, vector<1x128x32xf32>
    %1 = vector.shape_cast %0 : vector<1x128x32xf32> to vector<128x32xf32>
    %2 = arith.truncf %1 : vector<128x32xf32> to vector<128x32xbf16>
    %c0_2 = arith.constant 0 : index
    %c0_3 = arith.constant 0 : index
    %3 = vector.load %arg5[%c0_2, %c0_3] : memref<32x32xbf16, #tpu.memory_space<vmem>>, vector<32x32xbf16>
    %cst = arith.constant dense<0.000000e+00> : vector<128x32xf32>
    %4 = tpu.matmul %2, %3, %cst {dimension_numbers = #tpu.dot_dimension_numbers<[1], [0], [0], [1], [0, 0, 1, 1], [], []>} : vector<128x32xbf16>, vector<32x32xbf16>, vector<128x32xf32> -> vector<128x32xf32>
    %c0_4 = arith.constant 0 : index
    %c0_5 = arith.constant 0 : index
    %5 = vector.load %arg6[%c0_4, %c0_5] : memref<1x32xf32, #tpu.memory_space<vmem>>, vector<1x32xf32>
    %6 = vector.broadcast %5 : vector<1x32xf32> to vector<128x32xf32>
    %7 = arith.addf %4, %6 : vector<128x32xf32>
    %8 = arith.mulf %7, %7 : vector<128x32xf32>
    %9 = arith.mulf %7, %8 : vector<128x32xf32>
    %cst_6 = arith.constant 4.471500e-02 : f32
    %10 = vector.broadcast %cst_6 : f32 to vector<128x32xf32>
    %11 = arith.mulf %10, %9 : vector<128x32xf32>
    %12 = arith.addf %7, %11 : vector<128x32xf32>
    %cst_7 = arith.constant 0.797884583 : f32
    %13 = vector.broadcast %cst_7 : f32 to vector<128x32xf32>
    %14 = arith.mulf %13, %12 : vector<128x32xf32>
    %15 = math.tanh %14 : vector<128x32xf32>
    %cst_8 = arith.constant 1.000000e+00 : f32
    %16 = vector.broadcast %cst_8 : f32 to vector<128x32xf32>
    %17 = arith.addf %16, %15 : vector<128x32xf32>
    %cst_9 = arith.constant 5.000000e-01 : f32
    %18 = vector.broadcast %cst_9 : f32 to vector<128x32xf32>
    %19 = arith.mulf %18, %17 : vector<128x32xf32>
    %20 = arith.mulf %7, %19 : vector<128x32xf32>
    %cst_10 = arith.constant dense<0.000000e+00> : vector<128xf32>
    %21 = vector.multi_reduction <add>, %20, %cst_10 [1] : vector<128x32xf32> to vector<128xf32>
    %22 = vector.shape_cast %21 : vector<128xf32> to vector<128x1xf32>
    %cst_11 = arith.constant 3.200000e+01 : f32
    %23 = vector.broadcast %cst_11 : f32 to vector<128x1xf32>
    %24 = arith.divf %22, %23 : vector<128x1xf32>
    %25 = vector.broadcast %24 : vector<128x1xf32> to vector<128x32xf32>
    %26 = arith.subf %20, %25 : vector<128x32xf32>
    %27 = arith.mulf %26, %26 : vector<128x32xf32>
    %cst_12 = arith.constant dense<0.000000e+00> : vector<128xf32>
    %28 = vector.multi_reduction <add>, %27, %cst_12 [1] : vector<128x32xf32> to vector<128xf32>
    %29 = vector.shape_cast %28 : vector<128xf32> to vector<128x1xf32>
    %cst_13 = arith.constant 3.200000e+01 : f32
    %30 = vector.broadcast %cst_13 : f32 to vector<128x1xf32>
    %31 = arith.divf %29, %30 : vector<128x1xf32>
    %32 = vector.broadcast %24 : vector<128x1xf32> to vector<128x32xf32>
    %33 = arith.subf %20, %32 : vector<128x32xf32>
    %cst_14 = arith.constant 9.99999974E-6 : f32
    %34 = vector.broadcast %cst_14 : f32 to vector<128x1xf32>
    %35 = arith.addf %31, %34 : vector<128x1xf32>
    %36 = math.rsqrt %35 : vector<128x1xf32>
    %37 = vector.broadcast %36 : vector<128x1xf32> to vector<128x32xf32>
    %38 = arith.mulf %33, %37 : vector<128x32xf32>
    %c0_15 = arith.constant 0 : index
    %c0_16 = arith.constant 0 : index
    %c0_17 = arith.constant 0 : index
    %39 = vector.load %arg2[%c0_15, %c0_16, %c0_17] : memref<1x24x32xbf16, #tpu.memory_space<vmem>>, vector<1x24x32xbf16>
    %40 = vector.shape_cast %39 : vector<1x24x32xbf16> to vector<24x32xbf16>
    %41 = arith.truncf %38 : vector<128x32xf32> to vector<128x32xbf16>
    %cst_18 = arith.constant dense<0.000000e+00> : vector<24x128xf32>
    %42 = tpu.matmul %40, %41, %cst_18 {dimension_numbers = #tpu.dot_dimension_numbers<[1], [1], [0], [0], [0, 0, 1, 0], [], []>} : vector<24x32xbf16>, vector<128x32xbf16>, vector<24x128xf32> -> vector<24x128xf32>
    %c0_19 = arith.constant 0 : index
    %c0_20 = arith.constant 0 : index
    %c0_21 = arith.constant 0 : index
    %43 = vector.load %arg3[%c0_19, %c0_20, %c0_21] : memref<1x24x1xf32, #tpu.memory_space<vmem>>, vector<1x24x1xf32>
    %44 = vector.shape_cast %43 : vector<1x24x1xf32> to vector<24x1xf32>
    %45 = vector.broadcast %44 : vector<24x1xf32> to vector<24x128xf32>
    %46 = arith.addf %42, %45 : vector<24x128xf32>
    %c0_22 = arith.constant 0 : index
    %c0_23 = arith.constant 0 : index
    %c0_24 = arith.constant 0 : index
    %47 = vector.load %arg7[%c0_22, %c0_23, %c0_24] : memref<1x24x128xf32, #tpu.memory_space<vmem>>, vector<1x24x128xf32>
    %48 = vector.shape_cast %47 : vector<1x24x128xf32> to vector<24x128xf32>
    %49 = vector.shape_cast %46 : vector<24x128xf32> to vector<1x24x128xf32>
    tpu.vector_store %arg7[%c0_22, %c0_23, %c0_24], %49 {strides = array<i32>} : memref<1x24x128xf32, #tpu.memory_space<vmem>>, vector<1x24x128xf32>,
    return
  }
  func.func @transform_0(%arg0: i32, %arg1: i32) -> (i32, i32, i32) {
    %c0_i32 = arith.constant 0 : i32
    %c0_i32_0 = arith.constant 0 : i32
    %c0_i32_1 = arith.constant 0 : i32
    return %arg0, %c0_i32, %c0_i32_0 : i32, i32, i32
  }
  func.func @transform_1(%arg0: i32, %arg1: i32) -> (i32, i32, i32) {
    %c0_i32 = arith.constant 0 : i32
    %c0_i32_0 = arith.constant 0 : i32
    %c0_i32_1 = arith.constant 0 : i32
    return %arg0, %c0_i32, %c0_i32_0 : i32, i32, i32
  }
  func.func @transform_2(%arg0: i32, %arg1: i32) -> (i32, i32, i32) {
    %c0_i32 = arith.constant 0 : i32
    %c0_i32_0 = arith.constant 0 : i32
    return %arg0, %arg1, %c0_i32 : i32, i32, i32
  }
  func.func @transform_3(%arg0: i32, %arg1: i32) -> (i32, i32) {
    %c0_i32 = arith.constant 0 : i32
    %c0_i32_0 = arith.constant 0 : i32
    %c0_i32_1 = arith.constant 0 : i32
    return %c0_i32, %c0_i32_0 : i32, i32
  }
  func.func @transform_4(%arg0: i32, %arg1: i32) -> (i32, i32) {
    %c0_i32 = arith.constant 0 : i32
    %c0_i32_0 = arith.constant 0 : i32
    %c0_i32_1 = arith.constant 0 : i32
    return %c0_i32, %c0_i32_0 : i32, i32
  }
  func.func @transform_5(%arg0: i32, %arg1: i32) -> (i32, i32, i32) {
    %c0_i32 = arith.constant 0 : i32
    %c0_i32_0 = arith.constant 0 : i32
    return %arg0, %c0_i32, %arg1 : i32, i32, i32
  }
}

module attributes {stable_mosaic.version = 11 : i64} {
  func.func @qass_kernel(%arg0: i32, %arg1: i32, %arg2: memref<1x24x32xbf16, #tpu.memory_space<vmem>>, %arg3: memref<1x24x1xf32, #tpu.memory_space<vmem>>, %arg4: memref<1x128x32xf32, #tpu.memory_space<vmem>>, %arg5: memref<32x32xbf16, #tpu.memory_space<vmem>>, %arg6: memref<1x32xf32, #tpu.memory_space<vmem>>, %arg7: memref<1x24x128xf32, #tpu.memory_space<vmem>>) attributes {dimension_semantics = [#tpu.dimension_semantics<parallel>, #tpu.dimension_semantics<parallel>], iteration_bounds = array<i64: 2, 1>, scalar_prefetch = 0 : i64, scratch_operands = 0 : i64, tpu.core_type = #tpu.core_type<tc>, window_params = [{transform_indices = @transform_0, window_bounds = array<i64: 1, 24, 32>}, {transform_indices = @transform_1, window_bounds = array<i64: 1, 24, 1>}, {transform_indices = @transform_2, window_bounds = array<i64: 1, 128, 32>}, {pipeline_mode = #tpu.pipeline_mode<synchronous>, transform_indices = @transform_3, window_bounds = array<i64: 32, 32>}, {pipeline_mode = #tpu.pipeline_mode<synchronous>, transform_indices = @transform_4, window_bounds = array<i64: 1, 32>}, {transform_indices = @transform_5, window_bounds = array<i64: 1, 24, 128>}]} {
    %c0 = arith.constant 0 : index
    %c0_0 = arith.constant 0 : index
    %c0_1 = arith.constant 0 : index
    %0 = vector.load %arg4[%c0, %c0_0, %c0_1] : memref<1x128x32xf32, #tpu.memory_space<vmem>>, vector<1x128x32xf32>
    %1 = vector.shape_cast %0 : vector<1x128x32xf32> to vector<128x32xf32>
    %2 = arith.truncf %1 : vector<128x32xf32> to vector<128x32xbf16>
    %c0_2 = arith.constant 0 : index
    %c0_3 = arith.constant 0 : index
    %3 = vector.load %arg5[%c0_2, %c0_3] : memref<32x32xbf16, #tpu.memory_space<vmem>>, vector<32x32xbf16>
    %cst = arith.constant dense<0.000000e+00> : vector<128x32xf32>
    %4 = tpu.matmul %2, %3, %cst {dimension_numbers = #tpu.dot_dimension_numbers<[1], [0], [0], [1], [0, 0, 1, 1], [], []>} : vector<128x32xbf16>, vector<32x32xbf16>, vector<128x32xf32> -> vector<128x32xf32>
    %c0_4 = arith.constant 0 : index
    %c0_5 = arith.constant 0 : index
    %5 = vector.load %arg6[%c0_4, %c0_5] : memref<1x32xf32, #tpu.memory_space<vmem>>, vector<1x32xf32>
    %6 = vector.broadcast %5 : vector<1x32xf32> to vector<128x32xf32>
    %7 = arith.addf %4, %6 : vector<128x32xf32>
    %8 = arith.mulf %7, %7 : vector<128x32xf32>
    %9 = arith.mulf %7, %8 : vector<128x32xf32>
    %cst_6 = arith.constant 4.471500e-02 : f32
    %10 = vector.broadcast %cst_6 : f32 to vector<128x32xf32>
    %11 = arith.mulf %10, %9 : vector<128x32xf32>
    %12 = arith.addf %7, %11 : vector<128x32xf32>
    %cst_7 = arith.constant 0.797884583 : f32
    %13 = vector.broadcast %cst_7 : f32 to vector<128x32xf32>
    %14 = arith.mulf %13, %12 : vector<128x32xf32>
    %15 = math.tanh %14 : vector<128x32xf32>
    %cst_8 = arith.constant 1.000000e+00 : f32
    %16 = vector.broadcast %cst_8 : f32 to vector<128x32xf32>
    %17 = arith.addf %16, %15 : vector<128x32xf32>
    %cst_9 = arith.constant 5.000000e-01 : f32
    %18 = vector.broadcast %cst_9 : f32 to vector<128x32xf32>
    %19 = arith.mulf %18, %17 : vector<128x32xf32>
    %20 = arith.mulf %7, %19 : vector<128x32xf32>
    %cst_10 = arith.constant dense<0.000000e+00> : vector<128xf32>
    %21 = vector.multi_reduction <add>, %20, %cst_10 [1] : vector<128x32xf32> to vector<128xf32>
    %22 = vector.shape_cast %21 : vector<128xf32> to vector<128x1xf32>
    %cst_11 = arith.constant 3.200000e+01 : f32
    %23 = vector.broadcast %cst_11 : f32 to vector<128x1xf32>
    %24 = arith.divf %22, %23 : vector<128x1xf32>
    %25 = vector.broadcast %24 : vector<128x1xf32> to vector<128x32xf32>
    %26 = arith.subf %20, %25 : vector<128x32xf32>
    %27 = arith.mulf %26, %26 : vector<128x32xf32>
    %cst_12 = arith.constant dense<0.000000e+00> : vector<128xf32>
    %28 = vector.multi_reduction <add>, %27, %cst_12 [1] : vector<128x32xf32> to vector<128xf32>
    %29 = vector.shape_cast %28 : vector<128xf32> to vector<128x1xf32>
    %cst_13 = arith.constant 3.200000e+01 : f32
    %30 = vector.broadcast %cst_13 : f32 to vector<128x1xf32>
    %31 = arith.divf %29, %30 : vector<128x1xf32>
    %32 = vector.broadcast %24 : vector<128x1xf32> to vector<128x32xf32>
    %33 = arith.subf %20, %32 : vector<128x32xf32>
    %cst_14 = arith.constant 9.99999974E-6 : f32
    %34 = vector.broadcast %cst_14 : f32 to vector<128x1xf32>
    %35 = arith.addf %31, %34 : vector<128x1xf32>
    %36 = math.rsqrt %35 : vector<128x1xf32>
    %37 = vector.broadcast %36 : vector<128x1xf32> to vector<128x32xf32>
    %38 = arith.mulf %33, %37 : vector<128x32xf32>
    %c0_15 = arith.constant 0 : index
    %c0_16 = arith.constant 0 : index
    %c0_17 = arith.constant 0 : index
    %39 = vector.load %arg2[%c0_15, %c0_16, %c0_17] : memref<1x24x32xbf16, #tpu.memory_space<vmem>>, vector<1x24x32xbf16>
    %40 = vector.shape_cast %39 : vector<1x24x32xbf16> to vector<24x32xbf16>
    %41 = arith.truncf %38 : vector<128x32xf32> to vector<128x32xbf16>
    %cst_18 = arith.constant dense<0.000000e+00> : vector<24x128xf32>
    %42 = tpu.matmul %40, %41, %cst_18 {dimension_numbers = #tpu.dot_dimension_numbers<[1], [1], [0], [0], [0, 0, 1, 0], [], []>} : vector<24x32xbf16>, vector<128x32xbf16>, vector<24x128xf32> -> vector<24x128xf32>
    %c0_19 = arith.constant 0 : index
    %c0_20 = arith.constant 0 : index
    %c0_21 = arith.constant 0 : index
    %43 = vector.load %arg3[%c0_19, %c0_20, %c0_21] : memref<1x24x1xf32, #tpu.memory_space<vmem>>, vector<1x24x1xf32>
    %44 = vector.shape_cast %43 : vector<1x24x1xf32> to vector<24x1xf32>
    %45 = vector.broadcast %44 : vector<24x1xf32> to vector<24x128xf32>
    %46 = arith.addf %42, %45 : vector<24x128xf32>
    %c0_22 = arith.constant 0 : index
    %c0_23 = arith.constant 0 : index
    %c0_24 = arith.constant 0 : index
    %47 = vector.load %arg7[%c0_22, %c0_23, %c0_24] : memref<1x24x128xf32, #tpu.memory_space<vmem>>, vector<1x24x128xf32>
    %48 = vector.shape_cast %47 : vector<1x24x128xf32> to vector<24x128xf32>
    %49 = vector.shape_cast %46 : vector<24x128xf32> to vector<1x24x128xf32>
    tpu.vector_store %arg7[%c0_22, %c0_23, %c0_24], %49 {strides = array<i32>} : memref<1x24x128xf32, #tpu.memory_space<vmem>>, vector<1x24x128xf32>,
    return
  }
  func.func @transform_0(%arg0: i32, %arg1: i32) -> (i32, i32, i32) {
    %c0_i32 = arith.constant 0 : i32
    %c0_i32_0 = arith.constant 0 : i32
    %c0_i32_1 = arith.constant 0 : i32
    return %arg0, %c0_i32, %c0_i32_0 : i32, i32, i32
  }
  func.func @transform_1(%arg0: i32, %arg1: i32) -> (i32, i32, i32) {
    %c0_i32 = arith.constant 0 : i32
    %c0_i32_0 = arith.constant 0 : i32
    %c0_i32_1 = arith.constant 0 : i32
    return %arg0, %c0_i32, %c0_i32_0 : i32, i32, i32
  }
  func.func @transform_2(%arg0: i32, %arg1: i32) -> (i32, i32, i32) {
    %c0_i32 = arith.constant 0 : i32
    %c0_i32_0 = arith.constant 0 : i32
    return %arg0, %arg1, %c0_i32 : i32, i32, i32
  }
  func.func @transform_3(%arg0: i32, %arg1: i32) -> (i32, i32) {
    %c0_i32 = arith.constant 0 : i32
    %c0_i32_0 = arith.constant 0 : i32
    %c0_i32_1 = arith.constant 0 : i32
    return %c0_i32, %c0_i32_0 : i32, i32
  }
  func.func @transform_4(%arg0: i32, %arg1: i32) -> (i32, i32) {
    %c0_i32 = arith.constant 0 : i32
    %c0_i32_0 = arith.constant 0 : i32
    %c0_i32_1 = arith.constant 0 : i32
    return %c0_i32, %c0_i32_0 : i32, i32
  }
  func.func @transform_5(%arg0: i32, %arg1: i32) -> (i32, i32, i32) {
    %c0_i32 = arith.constant 0 : i32
    %c0_i32_0 = arith.constant 0 : i32
    return %arg0, %c0_i32, %arg1 : i32, i32, i32
  }
}

</mosaic_0001>

<llo_original>
// kernel: tpu_custom_call.1
$region0: #{tpu_custom_call.1}
  #allocation0 [shape = 'u32[]', space=smem, size = 0x4, offset = 0x4, fixed_abs, tag = 'smem constant byte address 0x4 - core index']
  #allocation1 [shape = 'u32[72,128]{1,0:T(1,128)}', space=vmem, size = 0x9000, scoped, tag = 'internal scratch']
  %s0 = inlined_call_operand.vmem [shape: bf16[2,24,32], index: 0, kind: input, shape index: {}]
  %s1 = inlined_call_operand.vmem [shape: f32[2,24,1], index: 1, kind: input, shape index: {}]
  %s2 = inlined_call_operand.vmem [shape: f32[2,128,32], index: 2, kind: input, shape index: {}]
  %s3 = inlined_call_operand.vmem [shape: bf16[32,32], index: 3, kind: input, shape index: {}]
  %s4 = inlined_call_operand.vmem [shape: f32[1,32], index: 4, kind: input, shape index: {}]
  %s5 = inlined_call_operand.hbm [shape: f32[2,24,128], index: 5, kind: output, shape index: {}]
  %s6 = sld [smem:[#allocation0]]
  $region53: #{tpu_custom_call.1} parent=0
    _
  %s8 = ssub.s32 1, %s6
  %s9 = scalar_select 0, %s8, %s6
  $region1: #{tpu_custom_call.1} parent=0
    #allocation2 [shape = 'u8[24576]{0}', space=vmem, size = 0x6000, scoped, tag = 'output window, operand 0']
    #allocation3 [shape = 's32[2]{0}', space=sflag, size = 0x8, scoped, tag = 'scoped memory for tpu_custom_call.1']
    %10 = vsyncpa [#allocation3], 0
    %s11 = scalar_lea.sflag [#allocation3], 1
    %12 = vsyncpa %s11, 0
    loop: start=0, step=1, limit=4
    $region2: #{tpu_custom_call.1} parent=1 // loop_pre_header
      _
    $region3: #{tpu_custom_call.1} parent=1 // loop_header
      %s14 = sphi 0, %s18
      %p15 = scmp.ge.s32.totalorder %s14, 4
      %s21 = sphi 0, %s33
      %s22 = sphi 0, %s29
      %s23 = sphi 0, %s21
      %s24 = sphi 0, %s22
      %s25 = sphi 0, %s23
      %s26 = sphi 0, %s24
      %s36 = sphi 0, %s38
      %s39 = sphi 0, %s36
      %s40 = sphi 0, %s39
      %s56 = sphi 0, %s40
      %s62 = sphi 0, %s64
      %s65 = sphi 0, %s62
      %s66 = sphi 0, %s65
      %s82 = sphi 0, %s66
      %s90 = sphi 0, %s92
      %s93 = sphi 0, %s90
      %s94 = sphi 0, %s93
      %s110 = sphi 0, %s94
      %s114 = sphi 0, %s114
      %s116 = sphi 0, %s114
      %s117 = sphi 0, %s116
      %s131 = sphi 0, %s117
      %s135 = sphi 0, %s135
      %s137 = sphi 0, %s135
      %s138 = sphi 0, %s137
      %s152 = sphi 0, %s138
      %s160 = sphi 0, %s162
      %s163 = sphi 0, %s160
      %s164 = sphi 0, %s163
      %s180 = sphi 0, %s164
    $region4: #{tpu_custom_call.1} parent=1 // loop_header_branch
      %17 = sbr.rel (%p15) target = $region8
    $region5: #{tpu_custom_call.1} parent=1 // loop_body
      %s19 = ssub.s32 %s14, 1
      %s20 = ssub.s32 %s14, 2
      %s27 = sadd.s32 1, %s22
      %p28 = scmp.ge.s32.totalorder %s27, 1
      %s29 = scalar_select %p28, 0, %s27
      %s30 = sadd.s32 1, %s21
      %s31 = scalar_select %p28, %s30, %s21
      %p32 = scmp.ge.s32.totalorder %s31, 2
      %s33 = scalar_select %p32, 0, %s31
      %s34 = ssub.s32 %s21, %s33
      %p35 = scmp.eq.s32.totalorder %s34, 0
      %s37 = sadd.s32 %s36, 1
      %s38 = scalar_select %p35, %s36, %s37
      %p41 = pneg %p35
      %p42 = scmp.eq.s32.totalorder %s14, 1
      %p43 = por %p41, %p42
      %p44 = scmp.ne.s32.totalorder %s36, %s39
      %p45 = scmp.eq.s32.totalorder %s14, 0
      %p46 = por %p44, %p45
      %p47 = scmp.ne.s32.totalorder %s36, %s39
      %p48 = scmp.eq.s32.totalorder %s19, 1
      %p49 = por %p47, %p48
      %p50 = scmp.ne.s32.totalorder %s39, %s40
      %p51 = scmp.eq.s32.totalorder %s19, 0
      %p52 = por %p50, %p51
      %p53 = scmp.ne.s32.totalorder %s39, %s40
      %p54 = scmp.eq.s32.totalorder %s20, 1
      %p55 = por %p53, %p54
      %p57 = scmp.ne.s32.totalorder %s40, %s56
      %p58 = scmp.eq.s32.totalorder %s20, 0
      %p59 = por %p57, %p58
      %s60 = ssub.s32 %s21, %s33
      %p61 = scmp.eq.s32.totalorder %s60, 0
      %s63 = sadd.s32 %s62, 1
      %s64 = scalar_select %p61, %s62, %s63
      %p67 = pneg %p61
      %p68 = scmp.eq.s32.totalorder %s14, 1
      %p69 = por %p67, %p68
      %p70 = scmp.ne.s32.totalorder %s62, %s65
      %p71 = scmp.eq.s32.totalorder %s14, 0
      %p72 = por %p70, %p71
      %p73 = scmp.ne.s32.totalorder %s62, %s65
      %p74 = scmp.eq.s32.totalorder %s19, 1
      %p75 = por %p73, %p74
      %p76 = scmp.ne.s32.totalorder %s65, %s66
      %p77 = scmp.eq.s32.totalorder %s19, 0
      %p78 = por %p76, %p77
      %p79 = scmp.ne.s32.totalorder %s65, %s66
      %p80 = scmp.eq.s32.totalorder %s20, 1
      %p81 = por %p79, %p80
      %p83 = scmp.ne.s32.totalorder %s66, %s82
      %p84 = scmp.eq.s32.totalorder %s20, 0
      %p85 = por %p83, %p84
      %s86 = ssub.s32 %s21, %s33
      %s87 = ssub.s32 %s22, %s29
      %s88 = sor.u32 %s86, %s87
      %p89 = scmp.eq.s32.totalorder %s88, 0
      %s91 = sadd.s32 %s90, 1
      %s92 = scalar_select %p89, %s90, %s91
      %p95 = pneg %p89
      %p96 = scmp.eq.s32.totalorder %s14, 1
      %p97 = por %p95, %p96
      %p98 = scmp.ne.s32.totalorder %s90, %s93
      %p99 = scmp.eq.s32.totalorder %s14, 0
      %p100 = por %p98, %p99
      %p101 = scmp.ne.s32.totalorder %s90, %s93
      %p102 = scmp.eq.s32.totalorder %s19, 1
      %p103 = por %p101, %p102
      %p104 = scmp.ne.s32.totalorder %s93, %s94
      %p105 = scmp.eq.s32.totalorder %s19, 0
      %p106 = por %p104, %p105
      %p107 = scmp.ne.s32.totalorder %s93, %s94
      %p108 = scmp.eq.s32.totalorder %s20, 1
      %p109 = por %p107, %p108
      %p111 = scmp.ne.s32.totalorder %s94, %s110
      %p112 = scmp.eq.s32.totalorder %s20, 0
      %p113 = por %p111, %p112
      %s115 = sadd.s32 %s114, 1
      %p118 = scmp.eq.s32.totalorder %s14, 1
      %p119 = scmp.ne.s32.totalorder %s114, %s116
      %p120 = scmp.eq.s32.totalorder %s14, 0
      %p121 = por %p119, %p120
      %p122 = scmp.ne.s32.totalorder %s114, %s116
      %p123 = scmp.eq.s32.totalorder %s19, 1
      %p124 = por %p122, %p123
      %p125 = scmp.ne.s32.totalorder %s116, %s117
      %p126 = scmp.eq.s32.totalorder %s19, 0
      %p127 = por %p125, %p126
      %p128 = scmp.ne.s32.totalorder %s116, %s117
      %p129 = scmp.eq.s32.totalorder %s20, 1
      %p130 = por %p128, %p129
      %p132 = scmp.ne.s32.totalorder %s117, %s131
      %p133 = scmp.eq.s32.totalorder %s20, 0
      %p134 = por %p132, %p133
      %s136 = sadd.s32 %s135, 1
      %p139 = scmp.eq.s32.totalorder %s14, 1
      %p140 = scmp.ne.s32.totalorder %s135, %s137
      %p141 = scmp.eq.s32.totalorder %s14, 0
      %p142 = por %p140, %p141
      %p143 = scmp.ne.s32.totalorder %s135, %s137
      %p144 = scmp.eq.s32.totalorder %s19, 1
      %p145 = por %p143, %p144
      %p146 = scmp.ne.s32.totalorder %s137, %s138
      %p147 = scmp.eq.s32.totalorder %s19, 0
      %p148 = por %p146, %p147
      %p149 = scmp.ne.s32.totalorder %s137, %s138
      %p150 = scmp.eq.s32.totalorder %s20, 1
      %p151 = por %p149, %p150
      %p153 = scmp.ne.s32.totalorder %s138, %s152
      %p154 = scmp.eq.s32.totalorder %s20, 0
      %p155 = por %p153, %p154
      %s156 = ssub.s32 %s21, %s33
      %s157 = ssub.s32 %s22, %s29
      %s158 = sor.u32 %s156, %s157
      %p159 = scmp.eq.s32.totalorder %s158, 0
      %s161 = sadd.s32 %s160, 1
      %s162 = scalar_select %p159, %s160, %s161
      %p165 = pneg %p159
      %p166 = scmp.eq.s32.totalorder %s14, 1
      %p167 = por %p165, %p166
      %p168 = scmp.ne.s32.totalorder %s160, %s163
      %p169 = scmp.eq.s32.totalorder %s14, 0
      %p170 = por %p168, %p169
      %p171 = scmp.ne.s32.totalorder %s160, %s163
      %p172 = scmp.eq.s32.totalorder %s19, 1
      %p173 = por %p171, %p172
      %p174 = scmp.ne.s32.totalorder %s163, %s164
      %p175 = scmp.eq.s32.totalorder %s19, 0
      %p176 = por %p174, %p175
      %p177 = scmp.ne.s32.totalorder %s163, %s164
      %p178 = scmp.eq.s32.totalorder %s20, 1
      %p179 = por %p177, %p178
      %p181 = scmp.ne.s32.totalorder %s164, %s180
      %p182 = scmp.eq.s32.totalorder %s20, 0
      %p183 = por %p181, %p182
      %p184 = scmp.le.s32.totalorder 1, %s14
      %p185 = scmp.lt.s32.totalorder %s14, 3
      %p186 = pnand %p184, %p185
      %p187 = pneg %p186
      // Predicated region
      $region9: #{tpu_custom_call.1} parent=5 // pred_check
        _
      $region10: #{tpu_custom_call.1} parent=5 // pred_check_branch
        %189 = sbr.rel (%p186) target = $region12
      $region11: #{tpu_custom_call.1} parent=5 // pred_region
        %s190 = ssub.s32 %s14, 1
        // Predicated region
        $region13: #{tpu_custom_call.1} parent=11 // pred_check
          %p191 = pneg %p127
        $region14: #{tpu_custom_call.1} parent=11 // pred_check_branch
          %193 = sbr.rel (%p191) target = $region16
        $region15: #{tpu_custom_call.1} parent=11 // pred_region
          _
        $region16: #{tpu_custom_call.1} parent=11 // pred_fallthru
          _
        // Predicated region
        $region17: #{tpu_custom_call.1} parent=11 // pred_check
          %p194 = pneg %p148
        $region18: #{tpu_custom_call.1} parent=11 // pred_check_branch
          %196 = sbr.rel (%p194) target = $region20
        $region19: #{tpu_custom_call.1} parent=11 // pred_region
          _
        $region20: #{tpu_custom_call.1} parent=11 // pred_fallthru
          _
      $region12: #{tpu_custom_call.1} parent=5 // pred_fallthru
        _
      %p197 = scmp.lt.s32.totalorder %s14, 2
      // Predicated region
      $region21: #{tpu_custom_call.1} parent=5 // pred_check
        %p198 = pneg %p197
      $region22: #{tpu_custom_call.1} parent=5 // pred_check_branch
        %200 = sbr.rel (%p198) target = $region24
      $region23: #{tpu_custom_call.1} parent=5 // pred_region
        // Predicated region
        $region25: #{tpu_custom_call.1} parent=23 // pred_check
          %p201 = pneg %p46
        $region26: #{tpu_custom_call.1} parent=23 // pred_check_branch
          %203 = sbr.rel (%p201) target = $region28
        $region27: #{tpu_custom_call.1} parent=23 // pred_region
          %p204 = scmp.lt.s32.totalorder %s21, 1
          %s205 = scalar_select %p204, %s21, 1
          %s206 = smul.addr %s205, 3
          %s207 = smul.addr %s206, 4
          %s208 = scalar_lea.vmem %s0, %s207
        $region28: #{tpu_custom_call.1} parent=23 // pred_fallthru
          _
        // Predicated region
        $region29: #{tpu_custom_call.1} parent=23 // pred_check
          %p209 = pneg %p72
        $region30: #{tpu_custom_call.1} parent=23 // pred_check_branch
          %211 = sbr.rel (%p209) target = $region32
        $region31: #{tpu_custom_call.1} parent=23 // pred_region
          %p212 = scmp.lt.s32.totalorder %s21, 1
          %s213 = scalar_select %p212, %s21, 1
          %s214 = smul.addr %s213, 3
          %s215 = smul.addr %s214, 8
          %s216 = scalar_lea.vmem %s1, %s215
        $region32: #{tpu_custom_call.1} parent=23 // pred_fallthru
          _
        // Predicated region
        $region33: #{tpu_custom_call.1} parent=23 // pred_check
          %p217 = pneg %p100
        $region34: #{tpu_custom_call.1} parent=23 // pred_check_branch
          %219 = sbr.rel (%p217) target = $region36
        $region35: #{tpu_custom_call.1} parent=23 // pred_region
          %s220 = smul.u32 16, %s22
          %p221 = scmp.lt.s32.totalorder %s21, 1
          %s222 = scalar_select %p221, %s21, 1
          %p223 = scmp.lt.s32.totalorder %s220, 15
          %s224 = scalar_select %p223, %s220, 15
          %s225 = smul.addr %s222, 16
          %s226 = sadd.s32 %s224, %s225
          %s227 = smul.addr %s226, 8
          %s228 = scalar_lea.vmem %s2, %s227
          %s229 = smul.u32 16, %s22
        $region36: #{tpu_custom_call.1} parent=23 // pred_fallthru
          _
      $region24: #{tpu_custom_call.1} parent=5 // pred_fallthru
        _
      %p230 = scmp.le.s32.totalorder 1, %s14
      %p231 = scmp.lt.s32.totalorder %s14, 3
      %p232 = pnand %p230, %p231
      %p233 = pneg %p232
      // Predicated region
      $region37: #{tpu_custom_call.1} parent=5 // pred_check
        _
      $region38: #{tpu_custom_call.1} parent=5 // pred_check_branch
        %235 = sbr.rel (%p232) target = $region40
      $region39: #{tpu_custom_call.1} parent=5 // pred_region
        %s236 = ssub.s32 %s14, 1
        %p237 = scmp.lt.s32.totalorder %s23, 1
        %s238 = scalar_select %p237, %s23, 1
        %s239 = smul.addr %s238, 3
        %s240 = smul.addr %s239, 4
        %s241 = scalar_lea.vmem %s0, %s240
        %p242 = pneg %p52
        %p243 = pneg %p49
        %p244 = scmp.lt.s32.totalorder %s23, 1
        %s245 = scalar_select %p244, %s23, 1
        %s246 = smul.addr %s245, 3
        %s247 = smul.addr %s246, 8
        %s248 = scalar_lea.vmem %s1, %s247
        %p249 = pneg %p78
        %p250 = pneg %p75
        %s251 = smul.u32 16, %s24
        %p252 = scmp.lt.s32.totalorder %s23, 1
        %s253 = scalar_select %p252, %s23, 1
        %p254 = scmp.lt.s32.totalorder %s251, 15
        %s255 = scalar_select %p254, %s251, 15
        %s256 = smul.addr %s253, 16
        %s257 = sadd.s32 %s255, %s256
        %s258 = smul.addr %s257, 8
        %s259 = scalar_lea.vmem %s2, %s258
        %p260 = pneg %p106
        %p261 = pneg %p103
        %p262 = pneg %p127
        %p263 = pneg %p124
        %p264 = pneg %p148
        %p265 = pneg %p145
        %p266 = pneg %p176
        %p267 = pneg %p173
        %s268 = sand.u32 %s163, 1
        %s269 = scalar_lea.sflag [#allocation3], %s268
        %s270 = sand.u32 %s163, 1
        %s271 = smul.addr %s270, 24
        %s272 = scalar_lea.vmem [#allocation2], %s271
        %p273 = scmp.lt.s32.totalorder %s23, 1
        %s274 = scalar_select %p273, %s23, 1
        %s275 = smul.addr %s274, 3
        %s276 = smul.addr %s275, 4
        %s277 = scalar_lea.vmem %s0, %s276
        %p278 = scmp.lt.s32.totalorder %s23, 1
        %s279 = scalar_select %p278, %s23, 1
        %s280 = smul.addr %s279, 3
        %s281 = smul.addr %s280, 8
        %s282 = scalar_lea.vmem %s1, %s281
        %s283 = smul.u32 16, %s24
        %p284 = scmp.lt.s32.totalorder %s23, 1
        %s285 = scalar_select %p284, %s23, 1
        %p286 = scmp.lt.s32.totalorder %s283, 15
        %s287 = scalar_select %p286, %s283, 15
        %s288 = smul.addr %s285, 16
        %s289 = sadd.s32 %s287, %s288
        %s290 = smul.addr %s289, 8
        %s291 = scalar_lea.vmem %s2, %s290
        %s292 = smul.u32 16, %s24
        %v294 = vld [vmem:[%s291] sm:$0xff]
        %v295 = vld [vmem:[%s291 + $0x8] sm:$0xff]
        %v296 = vld [vmem:[%s291 + $0x10] sm:$0xff]
        %v297 = vld [vmem:[%s291 + $0x18] sm:$0xff]
        %v298 = vld [vmem:[%s291 + $0x20] sm:$0xff]
        %v299 = vld [vmem:[%s291 + $0x28] sm:$0xff]
        %v300 = vld [vmem:[%s291 + $0x30] sm:$0xff]
        %v301 = vld [vmem:[%s291 + $0x38] sm:$0xff]
        %v302 = vld [vmem:[%s291 + $0x40] sm:$0xff]
        %v303 = vld [vmem:[%s291 + $0x48] sm:$0xff]
        %v304 = vld [vmem:[%s291 + $0x50] sm:$0xff]
        %v305 = vld [vmem:[%s291 + $0x58] sm:$0xff]
        %v306 = vld [vmem:[%s291 + $0x60] sm:$0xff]
        %v307 = vld [vmem:[%s291 + $0x68] sm:$0xff]
        %v308 = vld [vmem:[%s291 + $0x70] sm:$0xff]
        %v309 = vld [vmem:[%s291 + $0x78] sm:$0xff]
        %v310 = vpack.c.bf16 %v295, %v294
        %v311 = vpack.c.bf16 %v297, %v296
        %v312 = vpack.c.bf16 %v299, %v298
        %v313 = vpack.c.bf16 %v301, %v300
        %v314 = vpack.c.bf16 %v303, %v302
        %v315 = vpack.c.bf16 %v305, %v304
        %v316 = vpack.c.bf16 %v307, %v306
        %v317 = vpack.c.bf16 %v309, %v308
        %v318 = vld [vmem:[%s3] sm:$0xf]
        %v319 = vld [vmem:[%s3 + $0x4] sm:$0xf]
        %v320 = vld [vmem:[%s3 + $0x8] sm:$0xf]
        %v321 = vld [vmem:[%s3 + $0xc] sm:$0xf]
        %v322 = vld [vmem:[%s4] sm:$0x1]
        %v324 = vperm.slane %v322, 0
        %v330 = vunpack.c.l.b16 %v318
        %v331 = vunpack.c.l.b16 %v319
        %v332 = vunpack.c.l.b16 %v320
        %v333 = vunpack.c.l.b16 %v321
        %v334 = vpack.c.b16 %v331, %v330
        %v335 = vpack.c.b16 %v333, %v332
        %vm338 = vcmask 261120
        %v340 = vsel %vm338, %v310, 0
        %v343 = vsel %vm338, %v311, 0
        %v346 = vsel %vm338, %v312, 0
        %v349 = vsel %vm338, %v313, 0
        %v352 = vsel %vm338, %v314, 0
        %v355 = vsel %vm338, %v315, 0
        %v358 = vsel %vm338, %v316, 0
        %v361 = vsel %vm338, %v317, 0
        %363 = vmatpush.bf16.msra.mxu0 0
        %364 = vmatpush.bf16.msra.mxu0 0
        %365 = vmatpush.bf16.msra.mxu0 0
        %366 = vmatpush.bf16.msra.mxu0 0
        %367 = vmatpush.bf16.msra.mxu0 0
        %368 = vmatpush.bf16.msra.mxu0 0
        %369 = vmatpush.bf16.msra.mxu0 %v335
        %370 = vmatpush.bf16.msra.mxu0 %v334
        %371 = vmatmul.bf16.gmra.mxu0 %v340
        %v372 = vpop.f32.mrf.mxu0
        %v373 = vadd.f32 %v324, %v372
        %v374 = vpop.f32.mrf.mxu0
        %v375 = vadd.f32 %v324, %v374
        %376 = vmatmul.bf16.gmra.mxu0 %v343
        %v377 = vpop.f32.mrf.mxu0
        %v378 = vadd.f32 %v324, %v377
        %v379 = vpop.f32.mrf.mxu0
        %v380 = vadd.f32 %v324, %v379
        %381 = vmatmul.bf16.gmra.mxu0 %v346
        %v382 = vpop.f32.mrf.mxu0
        %v383 = vadd.f32 %v324, %v382
        %v384 = vpop.f32.mrf.mxu0
        %v385 = vadd.f32 %v324, %v384
        %386 = vmatmul.bf16.gmra.mxu0 %v349
        %v387 = vpop.f32.mrf.mxu0
        %v388 = vadd.f32 %v324, %v387
        %v389 = vpop.f32.mrf.mxu0
        %v390 = vadd.f32 %v324, %v389
        %391 = vmatmul.bf16.gmra.mxu0 %v352
        %v392 = vpop.f32.mrf.mxu0
        %v393 = vadd.f32 %v324, %v392
        %v394 = vpop.f32.mrf.mxu0
        %v395 = vadd.f32 %v324, %v394
        %396 = vmatmul.bf16.gmra.mxu0 %v355
        %v397 = vpop.f32.mrf.mxu0
        %v398 = vadd.f32 %v324, %v397
        %v399 = vpop.f32.mrf.mxu0
        %v400 = vadd.f32 %v324, %v399
        %401 = vmatmul.bf16.gmra.mxu0 %v358
        %v402 = vpop.f32.mrf.mxu0
        %v403 = vadd.f32 %v324, %v402
        %v404 = vpop.f32.mrf.mxu0
        %v405 = vadd.f32 %v324, %v404
        %406 = vmatmul.bf16.gmra.mxu0 %v361
        %v407 = vpop.f32.mrf.mxu0
        %v408 = vadd.f32 %v324, %v407
        %v409 = vpop.f32.mrf.mxu0
        %v410 = vadd.f32 %v324, %v409
        %411 = vdwg.mxu0
        %v412 = vmul.f32 %v373, %v373
        %v413 = vmul.f32 %v375, %v375
        %v414 = vmul.f32 %v378, %v378
        %v415 = vmul.f32 %v380, %v380
        %v416 = vmul.f32 %v383, %v383
        %v417 = vmul.f32 %v385, %v385
        %v418 = vmul.f32 %v388, %v388
        %v419 = vmul.f32 %v390, %v390
        %v420 = vmul.f32 %v393, %v393
        %v421 = vmul.f32 %v395, %v395
        %v422 = vmul.f32 %v398, %v398
        %v423 = vmul.f32 %v400, %v400
        %v424 = vmul.f32 %v403, %v403
        %v425 = vmul.f32 %v405, %v405
        %v426 = vmul.f32 %v408, %v408
        %v427 = vmul.f32 %v410, %v410
        %v428 = vmul.f32 %v373, %v412
        %v429 = vmul.f32 %v375, %v413
        %v430 = vmul.f32 %v378, %v414
        %v431 = vmul.f32 %v380, %v415
        %v432 = vmul.f32 %v383, %v416
        %v433 = vmul.f32 %v385, %v417
        %v434 = vmul.f32 %v388, %v418
        %v435 = vmul.f32 %v390, %v419
        %v436 = vmul.f32 %v393, %v420
        %v437 = vmul.f32 %v395, %v421
        %v438 = vmul.f32 %v398, %v422
        %v439 = vmul.f32 %v400, %v423
        %v440 = vmul.f32 %v403, %v424
        %v441 = vmul.f32 %v405, %v425
        %v442 = vmul.f32 %v408, %v426
        %v443 = vmul.f32 %v410, %v427
        %v444 = vmul.f32 %v428, 0.044715
        %v445 = vmul.f32 %v429, 0.044715
        %v446 = vmul.f32 %v430, 0.044715
        %v447 = vmul.f32 %v431, 0.044715
        %v448 = vmul.f32 %v432, 0.044715
        %v449 = vmul.f32 %v433, 0.044715
        %v450 = vmul.f32 %v434, 0.044715
        %v451 = vmul.f32 %v435, 0.044715
        %v452 = vmul.f32 %v436, 0.044715
        %v453 = vmul.f32 %v437, 0.044715
        %v454 = vmul.f32 %v438, 0.044715
        %v455 = vmul.f32 %v439, 0.044715
        %v456 = vmul.f32 %v440, 0.044715
        %v457 = vmul.f32 %v441, 0.044715
        %v458 = vmul.f32 %v442, 0.044715
        %v459 = vmul.f32 %v443, 0.044715
        %v460 = vadd.f32 %v373, %v444
        %v461 = vadd.f32 %v375, %v445
        %v462 = vadd.f32 %v378, %v446
        %v463 = vadd.f32 %v380, %v447
        %v464 = vadd.f32 %v383, %v448
        %v465 = vadd.f32 %v385, %v449
        %v466 = vadd.f32 %v388, %v450
        %v467 = vadd.f32 %v390, %v451
        %v468 = vadd.f32 %v393, %v452
        %v469 = vadd.f32 %v395, %v453
        %v470 = vadd.f32 %v398, %v454
        %v471 = vadd.f32 %v400, %v455
        %v472 = vadd.f32 %v403, %v456
        %v473 = vadd.f32 %v405, %v457
        %v474 = vadd.f32 %v408, %v458
        %v475 = vadd.f32 %v410, %v459
        %v476 = vmul.f32 %v460, 0.7978846
        %v477 = vmul.f32 %v461, 0.7978846
        %v478 = vmul.f32 %v462, 0.7978846
        %v479 = vmul.f32 %v463, 0.7978846
        %v480 = vmul.f32 %v464, 0.7978846
        %v481 = vmul.f32 %v465, 0.7978846
        %v482 = vmul.f32 %v466, 0.7978846
        %v483 = vmul.f32 %v467, 0.7978846
        %v484 = vmul.f32 %v468, 0.7978846
        %v485 = vmul.f32 %v469, 0.7978846
        %v486 = vmul.f32 %v470, 0.7978846
        %v487 = vmul.f32 %v471, 0.7978846
        %v488 = vmul.f32 %v472, 0.7978846
        %v489 = vmul.f32 %v473, 0.7978846
        %v490 = vmul.f32 %v474, 0.7978846
        %v491 = vmul.f32 %v475, 0.7978846
        %v492 = vtanh.pop %v476
        %v493 = vtanh.pop %v477
        %v494 = vtanh.pop %v478
        %v495 = vtanh.pop %v479
        %v496 = vtanh.pop %v480
        %v497 = vtanh.pop %v481
        %v498 = vtanh.pop %v482
        %v499 = vtanh.pop %v483
        %v500 = vtanh.pop %v484
        %v501 = vtanh.pop %v485
        %v502 = vtanh.pop %v486
        %v503 = vtanh.pop %v487
        %v504 = vtanh.pop %v488
        %v505 = vtanh.pop %v489
        %v506 = vtanh.pop %v490
        %v507 = vtanh.pop %v491
        %v508 = vadd.f32 %v492, 1.0
        %v509 = vadd.f32 %v493, 1.0
        %v510 = vadd.f32 %v494, 1.0
        %v511 = vadd.f32 %v495, 1.0
        %v512 = vadd.f32 %v496, 1.0
        %v513 = vadd.f32 %v497, 1.0
        %v514 = vadd.f32 %v498, 1.0
        %v515 = vadd.f32 %v499, 1.0
        %v516 = vadd.f32 %v500, 1.0
        %v517 = vadd.f32 %v501, 1.0
        %v518 = vadd.f32 %v502, 1.0
        %v519 = vadd.f32 %v503, 1.0
        %v520 = vadd.f32 %v504, 1.0
        %v521 = vadd.f32 %v505, 1.0
        %v522 = vadd.f32 %v506, 1.0
        %v523 = vadd.f32 %v507, 1.0
        %v524 = vmul.f32 %v508, 0.5
        %v525 = vmul.f32 %v509, 0.5
        %v526 = vmul.f32 %v510, 0.5
        %v527 = vmul.f32 %v511, 0.5
        %v528 = vmul.f32 %v512, 0.5
        %v529 = vmul.f32 %v513, 0.5
        %v530 = vmul.f32 %v514, 0.5
        %v531 = vmul.f32 %v515, 0.5
        %v532 = vmul.f32 %v516, 0.5
        %v533 = vmul.f32 %v517, 0.5
        %v534 = vmul.f32 %v518, 0.5
        %v535 = vmul.f32 %v519, 0.5
        %v536 = vmul.f32 %v520, 0.5
        %v537 = vmul.f32 %v521, 0.5
        %v538 = vmul.f32 %v522, 0.5
        %v539 = vmul.f32 %v523, 0.5
        %v540 = vmul.f32 %v373, %v524
        %v541 = vmul.f32 %v375, %v525
        %v542 = vmul.f32 %v378, %v526
        %v543 = vmul.f32 %v380, %v527
        %v544 = vmul.f32 %v383, %v528
        %v545 = vmul.f32 %v385, %v529
        %v546 = vmul.f32 %v388, %v530
        %v547 = vmul.f32 %v390, %v531
        %v548 = vmul.f32 %v393, %v532
        %v549 = vmul.f32 %v395, %v533
        %v550 = vmul.f32 %v398, %v534
        %v551 = vmul.f32 %v400, %v535
        %v552 = vmul.f32 %v403, %v536
        %v553 = vmul.f32 %v405, %v537
        %v554 = vmul.f32 %v408, %v538
        %v555 = vmul.f32 %v410, %v539
        %v556 = vsel %vm338, %v540, 0.0
        %557 = vadd.xlane.f32.xlu0 %v556
        %v558 = vpop.xlane.xlu0 %557
        %v559 = vsel %vm338, %v541, 0.0
        %560 = vadd.xlane.f32.xlu0 %v559
        %v561 = vpop.xlane.xlu0 %560
        %v562 = vsel %vm338, %v542, 0.0
        %563 = vadd.xlane.f32.xlu0 %v562
        %v564 = vpop.xlane.xlu0 %563
        %v565 = vsel %vm338, %v543, 0.0
        %566 = vadd.xlane.f32.xlu0 %v565
        %v567 = vpop.xlane.xlu0 %566
        %v568 = vsel %vm338, %v544, 0.0
        %569 = vadd.xlane.f32.xlu0 %v568
        %v570 = vpop.xlane.xlu0 %569
        %v571 = vsel %vm338, %v545, 0.0
        %572 = vadd.xlane.f32.xlu0 %v571
        %v573 = vpop.xlane.xlu0 %572
        %v574 = vsel %vm338, %v546, 0.0
        %575 = vadd.xlane.f32.xlu0 %v574
        %v576 = vpop.xlane.xlu0 %575
        %v577 = vsel %vm338, %v547, 0.0
        %578 = vadd.xlane.f32.xlu0 %v577
        %v579 = vpop.xlane.xlu0 %578
        %v580 = vsel %vm338, %v548, 0.0
        %581 = vadd.xlane.f32.xlu0 %v580
        %v582 = vpop.xlane.xlu0 %581
        %v583 = vsel %vm338, %v549, 0.0
        %584 = vadd.xlane.f32.xlu0 %v583
        %v585 = vpop.xlane.xlu0 %584
        %v586 = vsel %vm338, %v550, 0.0
        %587 = vadd.xlane.f32.xlu0 %v586
        %v588 = vpop.xlane.xlu0 %587
        %v589 = vsel %vm338, %v551, 0.0
        %590 = vadd.xlane.f32.xlu0 %v589
        %v591 = vpop.xlane.xlu0 %590
        %v592 = vsel %vm338, %v552, 0.0
        %593 = vadd.xlane.f32.xlu0 %v592
        %v594 = vpop.xlane.xlu0 %593
        %v595 = vsel %vm338, %v553, 0.0
        %596 = vadd.xlane.f32.xlu0 %v595
        %v597 = vpop.xlane.xlu0 %596
        %v598 = vsel %vm338, %v554, 0.0
        %599 = vadd.xlane.f32.xlu0 %v598
        %v600 = vpop.xlane.xlu0 %599
        %v601 = vsel %vm338, %v555, 0.0
        %602 = vadd.xlane.f32.xlu0 %v601
        %v603 = vpop.xlane.xlu0 %602
        %v604 = vrcp.pop 32.0
        %v605 = vmul.f32 32.0, %v604
        %v606 = vsub.f32 1.0, %v605
        %v607 = vmul.f32 %v604, %v606
        %v608 = vadd.f32 %v604, %v607
        %vm609 = vweird.f32 %v604
        %v610 = vsel %vm609, %v604, %v608
        %v611 = vmul.f32 %v558, %v610
        %v612 = vmul.f32 %v561, %v610
        %v613 = vmul.f32 %v564, %v610
        %v614 = vmul.f32 %v567, %v610
        %v615 = vmul.f32 %v570, %v610
        %v616 = vmul.f32 %v573, %v610
        %v617 = vmul.f32 %v576, %v610
        %v618 = vmul.f32 %v579, %v610
        %v619 = vmul.f32 %v582, %v610
        %v620 = vmul.f32 %v585, %v610
        %v621 = vmul.f32 %v588, %v610
        %v622 = vmul.f32 %v591, %v610
        %v623 = vmul.f32 %v594, %v610
        %v624 = vmul.f32 %v597, %v610
        %v625 = vmul.f32 %v600, %v610
        %v626 = vmul.f32 %v603, %v610
        %v627 = vsub.f32 %v540, %v611
        %v628 = vsub.f32 %v541, %v612
        %v629 = vsub.f32 %v542, %v613
        %v630 = vsub.f32 %v543, %v614
        %v631 = vsub.f32 %v544, %v615
        %v632 = vsub.f32 %v545, %v616
        %v633 = vsub.f32 %v546, %v617
        %v634 = vsub.f32 %v547, %v618
        %v635 = vsub.f32 %v548, %v619
        %v636 = vsub.f32 %v549, %v620
        %v637 = vsub.f32 %v550, %v621
        %v638 = vsub.f32 %v551, %v622
        %v639 = vsub.f32 %v552, %v623
        %v640 = vsub.f32 %v553, %v624
        %v641 = vsub.f32 %v554, %v625
        %v642 = vsub.f32 %v555, %v626
        %v643 = vmul.f32 %v627, %v627
        %v644 = vmul.f32 %v628, %v628
        %v645 = vmul.f32 %v629, %v629
        %v646 = vmul.f32 %v630, %v630
        %v647 = vmul.f32 %v631, %v631
        %v648 = vmul.f32 %v632, %v632
        %v649 = vmul.f32 %v633, %v633
        %v650 = vmul.f32 %v634, %v634
        %v651 = vmul.f32 %v635, %v635
        %v652 = vmul.f32 %v636, %v636
        %v653 = vmul.f32 %v637, %v637
        %v654 = vmul.f32 %v638, %v638
        %v655 = vmul.f32 %v639, %v639
        %v656 = vmul.f32 %v640, %v640
        %v657 = vmul.f32 %v641, %v641
        %v658 = vmul.f32 %v642, %v642
        %v659 = vsel %vm338, %v643, 0.0
        %660 = vadd.xlane.f32.xlu0 %v659
        %v661 = vpop.xlane.xlu0 %660
        %v662 = vsel %vm338, %v644, 0.0
        %663 = vadd.xlane.f32.xlu0 %v662
        %v664 = vpop.xlane.xlu0 %663
        %v665 = vsel %vm338, %v645, 0.0
        %666 = vadd.xlane.f32.xlu0 %v665
        %v667 = vpop.xlane.xlu0 %666
        %v668 = vsel %vm338, %v646, 0.0
        %669 = vadd.xlane.f32.xlu0 %v668
        %v670 = vpop.xlane.xlu0 %669
        %v671 = vsel %vm338, %v647, 0.0
        %672 = vadd.xlane.f32.xlu0 %v671
        %v673 = vpop.xlane.xlu0 %672
        %v674 = vsel %vm338, %v648, 0.0
        %675 = vadd.xlane.f32.xlu0 %v674
        %v676 = vpop.xlane.xlu0 %675
        %v677 = vsel %vm338, %v649, 0.0
        %678 = vadd.xlane.f32.xlu0 %v677
        %v679 = vpop.xlane.xlu0 %678
        %v680 = vsel %vm338, %v650, 0.0
        %681 = vadd.xlane.f32.xlu0 %v680
        %v682 = vpop.xlane.xlu0 %681
        %v683 = vsel %vm338, %v651, 0.0
        %684 = vadd.xlane.f32.xlu0 %v683
        %v685 = vpop.xlane.xlu0 %684
        %v686 = vsel %vm338, %v652, 0.0
        %687 = vadd.xlane.f32.xlu0 %v686
        %v688 = vpop.xlane.xlu0 %687
        %v689 = vsel %vm338, %v653, 0.0
        %690 = vadd.xlane.f32.xlu0 %v689
        %v691 = vpop.xlane.xlu0 %690
        %v692 = vsel %vm338, %v654, 0.0
        %693 = vadd.xlane.f32.xlu0 %v692
        %v694 = vpop.xlane.xlu0 %693
        %v695 = vsel %vm338, %v655, 0.0
        %696 = vadd.xlane.f32.xlu0 %v695
        %v697 = vpop.xlane.xlu0 %696
        %v698 = vsel %vm338, %v656, 0.0
        %699 = vadd.xlane.f32.xlu0 %v698
        %v700 = vpop.xlane.xlu0 %699
        %v701 = vsel %vm338, %v657, 0.0
        %702 = vadd.xlane.f32.xlu0 %v701
        %v703 = vpop.xlane.xlu0 %702
        %v704 = vsel %vm338, %v658, 0.0
        %705 = vadd.xlane.f32.xlu0 %v704
        %v706 = vpop.xlane.xlu0 %705
        %v707 = vmul.f32 %v661, %v610
        %v708 = vmul.f32 %v664, %v610
        %v709 = vmul.f32 %v667, %v610
        %v710 = vmul.f32 %v670, %v610
        %v711 = vmul.f32 %v673, %v610
        %v712 = vmul.f32 %v676, %v610
        %v713 = vmul.f32 %v679, %v610
        %v714 = vmul.f32 %v682, %v610
        %v715 = vmul.f32 %v685, %v610
        %v716 = vmul.f32 %v688, %v610
        %v717 = vmul.f32 %v691, %v610
        %v718 = vmul.f32 %v694, %v610
        %v719 = vmul.f32 %v697, %v610
        %v720 = vmul.f32 %v700, %v610
        %v721 = vmul.f32 %v703, %v610
        %v722 = vmul.f32 %v706, %v610
        %v723 = vadd.f32 %v707, 1e-05
        %v724 = vadd.f32 %v708, 1e-05
        %v725 = vadd.f32 %v709, 1e-05
        %v726 = vadd.f32 %v710, 1e-05
        %v727 = vadd.f32 %v711, 1e-05
        %v728 = vadd.f32 %v712, 1e-05
        %v729 = vadd.f32 %v713, 1e-05
        %v730 = vadd.f32 %v714, 1e-05
        %v731 = vadd.f32 %v715, 1e-05
        %v732 = vadd.f32 %v716, 1e-05
        %v733 = vadd.f32 %v717, 1e-05
        %v734 = vadd.f32 %v718, 1e-05
        %v735 = vadd.f32 %v719, 1e-05
        %v736 = vadd.f32 %v720, 1e-05
        %v737 = vadd.f32 %v721, 1e-05
        %v738 = vadd.f32 %v722, 1e-05
        %v739 = vrsqrt.pop %v723
        %v740 = vmul.f32 %v739, %v723
        %v741 = vmul.f32 %v740, %v739
        %v742 = vmul.f32 0.5, %v741
        %v743 = vsub.f32 1.5, %v742
        %v744 = vmul.f32 %v739, %v743
        %vm745 = vweird.f32 %v723
        %vm746 = vweird.f32 %v739
        %vm747 = vmor %vm745, %vm746
        %v748 = vsel %vm747, %v739, %v744
        %v749 = vrsqrt.pop %v724
        %v750 = vmul.f32 %v749, %v724
        %v751 = vmul.f32 %v750, %v749
        %v752 = vmul.f32 0.5, %v751
        %v753 = vsub.f32 1.5, %v752
        %v754 = vmul.f32 %v749, %v753
        %vm755 = vweird.f32 %v724
        %vm756 = vweird.f32 %v749
        %vm757 = vmor %vm755, %vm756
        %v758 = vsel %vm757, %v749, %v754
        %v759 = vrsqrt.pop %v725
        %v760 = vmul.f32 %v759, %v725
        %v761 = vmul.f32 %v760, %v759
        %v762 = vmul.f32 0.5, %v761
        %v763 = vsub.f32 1.5, %v762
        %v764 = vmul.f32 %v759, %v763
        %vm765 = vweird.f32 %v725
        %vm766 = vweird.f32 %v759
        %vm767 = vmor %vm765, %vm766
        %v768 = vsel %vm767, %v759, %v764
        %v769 = vrsqrt.pop %v726
        %v770 = vmul.f32 %v769, %v726
        %v771 = vmul.f32 %v770, %v769
        %v772 = vmul.f32 0.5, %v771
        %v773 = vsub.f32 1.5, %v772
        %v774 = vmul.f32 %v769, %v773
        %vm775 = vweird.f32 %v726
        %vm776 = vweird.f32 %v769
        %vm777 = vmor %vm775, %vm776
        %v778 = vsel %vm777, %v769, %v774
        %v779 = vrsqrt.pop %v727
        %v780 = vmul.f32 %v779, %v727
        %v781 = vmul.f32 %v780, %v779
        %v782 = vmul.f32 0.5, %v781
        %v783 = vsub.f32 1.5, %v782
        %v784 = vmul.f32 %v779, %v783
        %vm785 = vweird.f32 %v727
        %vm786 = vweird.f32 %v779
        %vm787 = vmor %vm785, %vm786
        %v788 = vsel %vm787, %v779, %v784
        %v789 = vrsqrt.pop %v728
        %v790 = vmul.f32 %v789, %v728
        %v791 = vmul.f32 %v790, %v789
        %v792 = vmul.f32 0.5, %v791
        %v793 = vsub.f32 1.5, %v792
        %v794 = vmul.f32 %v789, %v793
        %vm795 = vweird.f32 %v728
        %vm796 = vweird.f32 %v789
        %vm797 = vmor %vm795, %vm796
        %v798 = vsel %vm797, %v789, %v794
        %v799 = vrsqrt.pop %v729
        %v800 = vmul.f32 %v799, %v729
        %v801 = vmul.f32 %v800, %v799
        %v802 = vmul.f32 0.5, %v801
        %v803 = vsub.f32 1.5, %v802
        %v804 = vmul.f32 %v799, %v803
        %vm805 = vweird.f32 %v729
        %vm806 = vweird.f32 %v799
        %vm807 = vmor %vm805, %vm806
        %v808 = vsel %vm807, %v799, %v804
        %v809 = vrsqrt.pop %v730
        %v810 = vmul.f32 %v809, %v730
        %v811 = vmul.f32 %v810, %v809
        %v812 = vmul.f32 0.5, %v811
        %v813 = vsub.f32 1.5, %v812
        %v814 = vmul.f32 %v809, %v813
        %vm815 = vweird.f32 %v730
        %vm816 = vweird.f32 %v809
        %vm817 = vmor %vm815, %vm816
        %v818 = vsel %vm817, %v809, %v814
        %v819 = vrsqrt.pop %v731
        %v820 = vmul.f32 %v819, %v731
        %v821 = vmul.f32 %v820, %v819
        %v822 = vmul.f32 0.5, %v821
        %v823 = vsub.f32 1.5, %v822
        %v824 = vmul.f32 %v819, %v823
        %vm825 = vweird.f32 %v731
        %vm826 = vweird.f32 %v819
        %vm827 = vmor %vm825, %vm826
        %v828 = vsel %vm827, %v819, %v824
        %v829 = vrsqrt.pop %v732
        %v830 = vmul.f32 %v829, %v732
        %v831 = vmul.f32 %v830, %v829
        %v832 = vmul.f32 0.5, %v831
        %v833 = vsub.f32 1.5, %v832
        %v834 = vmul.f32 %v829, %v833
        %vm835 = vweird.f32 %v732
        %vm836 = vweird.f32 %v829
        %vm837 = vmor %vm835, %vm836
        %v838 = vsel %vm837, %v829, %v834
        %v839 = vrsqrt.pop %v733
        %v840 = vmul.f32 %v839, %v733
        %v841 = vmul.f32 %v840, %v839
        %v842 = vmul.f32 0.5, %v841
        %v843 = vsub.f32 1.5, %v842
        %v844 = vmul.f32 %v839, %v843
        %vm845 = vweird.f32 %v733
        %vm846 = vweird.f32 %v839
        %vm847 = vmor %vm845, %vm846
        %v848 = vsel %vm847, %v839, %v844
        %v849 = vrsqrt.pop %v734
        %v850 = vmul.f32 %v849, %v734
        %v851 = vmul.f32 %v850, %v849
        %v852 = vmul.f32 0.5, %v851
        %v853 = vsub.f32 1.5, %v852
        %v854 = vmul.f32 %v849, %v853
        %vm855 = vweird.f32 %v734
        %vm856 = vweird.f32 %v849
        %vm857 = vmor %vm855, %vm856
        %v858 = vsel %vm857, %v849, %v854
        %v859 = vrsqrt.pop %v735
        %v860 = vmul.f32 %v859, %v735
        %v861 = vmul.f32 %v860, %v859
        %v862 = vmul.f32 0.5, %v861
        %v863 = vsub.f32 1.5, %v862
        %v864 = vmul.f32 %v859, %v863
        %vm865 = vweird.f32 %v735
        %vm866 = vweird.f32 %v859
        %vm867 = vmor %vm865, %vm866
        %v868 = vsel %vm867, %v859, %v864
        %v869 = vrsqrt.pop %v736
        %v870 = vmul.f32 %v869, %v736
        %v871 = vmul.f32 %v870, %v869
        %v872 = vmul.f32 0.5, %v871
        %v873 = vsub.f32 1.5, %v872
        %v874 = vmul.f32 %v869, %v873
        %vm875 = vweird.f32 %v736
        %vm876 = vweird.f32 %v869
        %vm877 = vmor %vm875, %vm876
        %v878 = vsel %vm877, %v869, %v874
        %v879 = vrsqrt.pop %v737
        %v880 = vmul.f32 %v879, %v737
        %v881 = vmul.f32 %v880, %v879
        %v882 = vmul.f32 0.5, %v881
        %v883 = vsub.f32 1.5, %v882
        %v884 = vmul.f32 %v879, %v883
        %vm885 = vweird.f32 %v737
        %vm886 = vweird.f32 %v879
        %vm887 = vmor %vm885, %vm886
        %v888 = vsel %vm887, %v879, %v884
        %v889 = vrsqrt.pop %v738
        %v890 = vmul.f32 %v889, %v738
        %v891 = vmul.f32 %v890, %v889
        %v892 = vmul.f32 0.5, %v891
        %v893 = vsub.f32 1.5, %v892
        %v894 = vmul.f32 %v889, %v893
        %vm895 = vweird.f32 %v738
        %vm896 = vweird.f32 %v889
        %vm897 = vmor %vm895, %vm896
        %v898 = vsel %vm897, %v889, %v894
        %v899 = vmul.f32 %v627, %v748
        %v900 = vmul.f32 %v628, %v758
        %v901 = vmul.f32 %v629, %v768
        %v902 = vmul.f32 %v630, %v778
        %v903 = vmul.f32 %v631, %v788
        %v904 = vmul.f32 %v632, %v798
        %v905 = vmul.f32 %v633, %v808
        %v906 = vmul.f32 %v634, %v818
        %v907 = vmul.f32 %v635, %v828
        %v908 = vmul.f32 %v636, %v838
        %v909 = vmul.f32 %v637, %v848
        %v910 = vmul.f32 %v638, %v858
        %v911 = vmul.f32 %v639, %v868
        %v912 = vmul.f32 %v640, %v878
        %v913 = vmul.f32 %v641, %v888
        %v914 = vmul.f32 %v642, %v898
        %v915 = vld [vmem:[%s277] sm:$0xf]
        %v916 = vld [vmem:[%s277 + $0x4] sm:$0xf]
        %v917 = vld [vmem:[%s277 + $0x8] sm:$0xf]
        %v918 = vpack.c.bf16 %v900, %v899
        %v919 = vpack.c.bf16 %v902, %v901
        %v920 = vpack.c.bf16 %v904, %v903
        %v921 = vpack.c.bf16 %v906, %v905
        %v922 = vpack.c.bf16 %v908, %v907
        %v923 = vpack.c.bf16 %v910, %v909
        %v924 = vpack.c.bf16 %v912, %v911
        %v925 = vpack.c.bf16 %v914, %v913
        %v926 = vld [vmem:[%s282] sm:$0xff]
        %v927 = vld [vmem:[%s282 + $0x8] sm:$0xff]
        %v928 = vld [vmem:[%s282 + $0x10] sm:$0xff]
        %930 = vset.pattern.permute.xlu0 0
        %931 = vperm.xlu0 %930, %v926
        %v932 = vpop.permute.xlu0 %931
        %935 = vset.pattern.permute.xlu0 0
        %936 = vperm.xlu0 %935, %v927
        %v937 = vpop.permute.xlu0 %936
        %940 = vset.pattern.permute.xlu0 0
        %941 = vperm.xlu0 %940, %v928
        %v942 = vpop.permute.xlu0 %941
        %v947 = vunpack.c.l.b16 %v915
        %v948 = vunpack.c.l.b16 %v916
        %v949 = vunpack.c.l.b16 %v917
        %v950 = vpack.c.b16 %v948, %v947
        %v951 = vpack.c.b16 %v949, %v949
        %v953 = vsel %vm338, %v950, 0
        %v956 = vsel %vm338, %v951, 0
        %v959 = vsel %vm338, %v918, 0
        %v962 = vsel %vm338, %v919, 0
        %v965 = vsel %vm338, %v920, 0
        %v968 = vsel %vm338, %v921, 0
        %v971 = vsel %vm338, %v922, 0
        %v974 = vsel %vm338, %v923, 0
        %v977 = vsel %vm338, %v924, 0
        %v980 = vsel %vm338, %v925, 0
        %982 = vmatpush.bf16.xpose.msra.mxu0 %v980
        %983 = vmatpush.bf16.xpose.msra.mxu0 %v977
        %984 = vmatpush.bf16.xpose.msra.mxu0 %v974
        %985 = vmatpush.bf16.xpose.msra.mxu0 %v971
        %986 = vmatpush.bf16.xpose.msra.mxu0 %v968
        %987 = vmatpush.bf16.xpose.msra.mxu0 %v965
        %988 = vmatpush.bf16.xpose.msra.mxu0 %v962
        %989 = vmatpush.bf16.xpose.msra.mxu0 %v959
        %990 = vmatmul.bf16.gmra.mxu0 %v953
        %v991 = vpop.f32.mrf.mxu0
        %v992 = vadd.f32 %v932, %v991
        %v993 = vpop.f32.mrf.mxu0
        %v994 = vadd.f32 %v937, %v993
        %995 = vmatmul.bf16.gmra.mxu0 %v956
        %v996 = vpop.f32.mrf.mxu0
        %v997 = vadd.f32 %v942, %v996
        %v998 = vpop.f32.mrf.mxu0
        %999 = vdwg.mxu0
        %1000 = vst [vmem:[%s272] sm:$0xff] %v992
        %1001 = vst [vmem:[%s272 + $0x8] sm:$0xff] %v994
        %1002 = vst [vmem:[%s272 + $0x10] sm:$0xff] %v997
        %s1003 = sand.u32 %s163, 1
        %s1004 = scalar_lea.sflag [#allocation3], %s1003
        %s1005 = sand.u32 %s163, 1
        %s1006 = smul.addr %s1005, 24
        %s1007 = scalar_lea.vmem [#allocation2], %s1006
        // Predicated region
        $region41: #{tpu_custom_call.1} parent=39 // pred_check
          %p1008 = pneg %p173
        $region42: #{tpu_custom_call.1} parent=39 // pred_check_branch
          %1010 = sbr.rel (%p1008) target = $region44
        $region43: #{tpu_custom_call.1} parent=39 // pred_region
          %1012 = vsyncadd %s1004, 0
          %s1013 = smul.addr %s23, 3
          %s1014 = sadd.s32 %s24, %s1013
          %s1015 = smul.addr %s1014, 8
          %s1016 = scalar_lea.hbm %s5, %s1015
          %s1017 = sshll.u32 %s1007, 4
          %s1018 = int_to_ptr.vmem [resolvable:$true] %s1017
          %s1019 = sshll.u32 %s1016, 4
          %s1020 = int_to_ptr.hbm [resolvable:$true] %s1019
          %1025 = dma.vmem_to_hbm [thread:$0]  %s1018, 384, %s1020, %s1004, 128, 128, 8
        $region44: #{tpu_custom_call.1} parent=39 // pred_fallthru
          _
      $region40: #{tpu_custom_call.1} parent=5 // pred_fallthru
        _
      %p1026 = scmp.le.s32.totalorder 2, %s14
      // Predicated region
      $region45: #{tpu_custom_call.1} parent=5 // pred_check
        %p1027 = pneg %p1026
      $region46: #{tpu_custom_call.1} parent=5 // pred_check_branch
        %1029 = sbr.rel (%p1027) target = $region48
      $region47: #{tpu_custom_call.1} parent=5 // pred_region
        %s1030 = ssub.s32 %s14, 2
        // Predicated region
        $region49: #{tpu_custom_call.1} parent=47 // pred_check
          %p1031 = pneg %p179
        $region50: #{tpu_custom_call.1} parent=47 // pred_check_branch
          %1033 = sbr.rel (%p1031) target = $region52
        $region51: #{tpu_custom_call.1} parent=47 // pred_region
          %s1034 = sand.u32 %s164, 1
          %s1035 = scalar_lea.sflag [#allocation3], %s1034
          %s1036 = sand.u32 %s164, 1
          %s1037 = smul.addr %s1036, 24
          %s1038 = scalar_lea.vmem [#allocation2], %s1037
          %1040 = dma.done %s1035, 384
        $region52: #{tpu_custom_call.1} parent=47 // pred_fallthru
          _
      $region48: #{tpu_custom_call.1} parent=5 // pred_fallthru
        _
    $region6: #{tpu_custom_call.1} parent=1 // loop_footer
      %s18 = sadd.s32 1, %s14
    $region7: #{tpu_custom_call.1} parent=1 // loop_footer_branch
      %13 = sbr.rel target = $region3
    $region8: #{tpu_custom_call.1} parent=1 // loop_exit
      _
    %1041 = vsyncpa [#allocation3], 1
    %s1042 = scalar_lea.sflag [#allocation3], 1
    %1043 = vsyncpa %s1042, 1

// kernel: tpu_custom_call.1
$region0: #{tpu_custom_call.1}
  #allocation0 [shape = 'u32[]', space=smem, size = 0x4, offset = 0x4, fixed_abs, tag = 'smem constant byte address 0x4 - core index']
  #allocation1 [shape = 'u32[72,128]{1,0:T(1,128)}', space=vmem, size = 0x9000, scoped, tag = 'internal scratch']
  %s0 = inlined_call_operand.vmem [shape: bf16[2,24,32], index: 0, kind: input, shape index: {}]
  %s1 = inlined_call_operand.vmem [shape: f32[2,24,1], index: 1, kind: input, shape index: {}]
  %s2 = inlined_call_operand.vmem [shape: f32[2,128,32], index: 2, kind: input, shape index: {}]
  %s3 = inlined_call_operand.vmem [shape: bf16[32,32], index: 3, kind: input, shape index: {}]
  %s4 = inlined_call_operand.vmem [shape: f32[1,32], index: 4, kind: input, shape index: {}]
  %s5 = inlined_call_operand.hbm [shape: f32[2,24,128], index: 5, kind: output, shape index: {}]
  %s6 = sld [smem:[#allocation0]]
  $region53: #{tpu_custom_call.1} parent=0
    _
  %s8 = ssub.s32 1, %s6
  %s9 = scalar_select 0, %s8, %s6
  $region1: #{tpu_custom_call.1} parent=0
    #allocation2 [shape = 'u8[24576]{0}', space=vmem, size = 0x6000, scoped, tag = 'output window, operand 0']
    #allocation3 [shape = 's32[2]{0}', space=sflag, size = 0x8, scoped, tag = 'scoped memory for tpu_custom_call.1']
    %10 = vsyncpa [#allocation3], 0
    %s11 = scalar_lea.sflag [#allocation3], 1
    %12 = vsyncpa %s11, 0
    loop: start=0, step=1, limit=4
    $region2: #{tpu_custom_call.1} parent=1 // loop_pre_header
      _
    $region3: #{tpu_custom_call.1} parent=1 // loop_header
      %s14 = sphi 0, %s18
      %p15 = scmp.ge.s32.totalorder %s14, 4
      %s21 = sphi 0, %s33
      %s22 = sphi 0, %s29
      %s23 = sphi 0, %s21
      %s24 = sphi 0, %s22
      %s25 = sphi 0, %s23
      %s26 = sphi 0, %s24
      %s36 = sphi 0, %s38
      %s39 = sphi 0, %s36
      %s40 = sphi 0, %s39
      %s56 = sphi 0, %s40
      %s62 = sphi 0, %s64
      %s65 = sphi 0, %s62
      %s66 = sphi 0, %s65
      %s82 = sphi 0, %s66
      %s90 = sphi 0, %s92
      %s93 = sphi 0, %s90
      %s94 = sphi 0, %s93
      %s110 = sphi 0, %s94
      %s114 = sphi 0, %s114
      %s116 = sphi 0, %s114
      %s117 = sphi 0, %s116
      %s131 = sphi 0, %s117
      %s135 = sphi 0, %s135
      %s137 = sphi 0, %s135
      %s138 = sphi 0, %s137
      %s152 = sphi 0, %s138
      %s160 = sphi 0, %s162
      %s163 = sphi 0, %s160
      %s164 = sphi 0, %s163
      %s180 = sphi 0, %s164
    $region4: #{tpu_custom_call.1} parent=1 // loop_header_branch
      %17 = sbr.rel (%p15) target = $region8
    $region5: #{tpu_custom_call.1} parent=1 // loop_body
      %s19 = ssub.s32 %s14, 1
      %s20 = ssub.s32 %s14, 2
      %s27 = sadd.s32 1, %s22
      %p28 = scmp.ge.s32.totalorder %s27, 1
      %s29 = scalar_select %p28, 0, %s27
      %s30 = sadd.s32 1, %s21
      %s31 = scalar_select %p28, %s30, %s21
      %p32 = scmp.ge.s32.totalorder %s31, 2
      %s33 = scalar_select %p32, 0, %s31
      %s34 = ssub.s32 %s21, %s33
      %p35 = scmp.eq.s32.totalorder %s34, 0
      %s37 = sadd.s32 %s36, 1
      %s38 = scalar_select %p35, %s36, %s37
      %p41 = pneg %p35
      %p42 = scmp.eq.s32.totalorder %s14, 1
      %p43 = por %p41, %p42
      %p44 = scmp.ne.s32.totalorder %s36, %s39
      %p45 = scmp.eq.s32.totalorder %s14, 0
      %p46 = por %p44, %p45
      %p47 = scmp.ne.s32.totalorder %s36, %s39
      %p48 = scmp.eq.s32.totalorder %s19, 1
      %p49 = por %p47, %p48
      %p50 = scmp.ne.s32.totalorder %s39, %s40
      %p51 = scmp.eq.s32.totalorder %s19, 0
      %p52 = por %p50, %p51
      %p53 = scmp.ne.s32.totalorder %s39, %s40
      %p54 = scmp.eq.s32.totalorder %s20, 1
      %p55 = por %p53, %p54
      %p57 = scmp.ne.s32.totalorder %s40, %s56
      %p58 = scmp.eq.s32.totalorder %s20, 0
      %p59 = por %p57, %p58
      %s60 = ssub.s32 %s21, %s33
      %p61 = scmp.eq.s32.totalorder %s60, 0
      %s63 = sadd.s32 %s62, 1
      %s64 = scalar_select %p61, %s62, %s63
      %p67 = pneg %p61
      %p68 = scmp.eq.s32.totalorder %s14, 1
      %p69 = por %p67, %p68
      %p70 = scmp.ne.s32.totalorder %s62, %s65
      %p71 = scmp.eq.s32.totalorder %s14, 0
      %p72 = por %p70, %p71
      %p73 = scmp.ne.s32.totalorder %s62, %s65
      %p74 = scmp.eq.s32.totalorder %s19, 1
      %p75 = por %p73, %p74
      %p76 = scmp.ne.s32.totalorder %s65, %s66
      %p77 = scmp.eq.s32.totalorder %s19, 0
      %p78 = por %p76, %p77
      %p79 = scmp.ne.s32.totalorder %s65, %s66
      %p80 = scmp.eq.s32.totalorder %s20, 1
      %p81 = por %p79, %p80
      %p83 = scmp.ne.s32.totalorder %s66, %s82
      %p84 = scmp.eq.s32.totalorder %s20, 0
      %p85 = por %p83, %p84
      %s86 = ssub.s32 %s21, %s33
      %s87 = ssub.s32 %s22, %s29
      %s88 = sor.u32 %s86, %s87
      %p89 = scmp.eq.s32.totalorder %s88, 0
      %s91 = sadd.s32 %s90, 1
      %s92 = scalar_select %p89, %s90, %s91
      %p95 = pneg %p89
      %p96 = scmp.eq.s32.totalorder %s14, 1
      %p97 = por %p95, %p96
      %p98 = scmp.ne.s32.totalorder %s90, %s93
      %p99 = scmp.eq.s32.totalorder %s14, 0
      %p100 = por %p98, %p99
      %p101 = scmp.ne.s32.totalorder %s90, %s93
      %p102 = scmp.eq.s32.totalorder %s19, 1
      %p103 = por %p101, %p102
      %p104 = scmp.ne.s32.totalorder %s93, %s94
      %p105 = scmp.eq.s32.totalorder %s19, 0
      %p106 = por %p104, %p105
      %p107 = scmp.ne.s32.totalorder %s93, %s94
      %p108 = scmp.eq.s32.totalorder %s20, 1
      %p109 = por %p107, %p108
      %p111 = scmp.ne.s32.totalorder %s94, %s110
      %p112 = scmp.eq.s32.totalorder %s20, 0
      %p113 = por %p111, %p112
      %s115 = sadd.s32 %s114, 1
      %p118 = scmp.eq.s32.totalorder %s14, 1
      %p119 = scmp.ne.s32.totalorder %s114, %s116
      %p120 = scmp.eq.s32.totalorder %s14, 0
      %p121 = por %p119, %p120
      %p122 = scmp.ne.s32.totalorder %s114, %s116
      %p123 = scmp.eq.s32.totalorder %s19, 1
      %p124 = por %p122, %p123
      %p125 = scmp.ne.s32.totalorder %s116, %s117
      %p126 = scmp.eq.s32.totalorder %s19, 0
      %p127 = por %p125, %p126
      %p128 = scmp.ne.s32.totalorder %s116, %s117
      %p129 = scmp.eq.s32.totalorder %s20, 1
      %p130 = por %p128, %p129
      %p132 = scmp.ne.s32.totalorder %s117, %s131
      %p133 = scmp.eq.s32.totalorder %s20, 0
      %p134 = por %p132, %p133
      %s136 = sadd.s32 %s135, 1
      %p139 = scmp.eq.s32.totalorder %s14, 1
      %p140 = scmp.ne.s32.totalorder %s135, %s137
      %p141 = scmp.eq.s32.totalorder %s14, 0
      %p142 = por %p140, %p141
      %p143 = scmp.ne.s32.totalorder %s135, %s137
      %p144 = scmp.eq.s32.totalorder %s19, 1
      %p145 = por %p143, %p144
      %p146 = scmp.ne.s32.totalorder %s137, %s138
      %p147 = scmp.eq.s32.totalorder %s19, 0
      %p148 = por %p146, %p147
      %p149 = scmp.ne.s32.totalorder %s137, %s138
      %p150 = scmp.eq.s32.totalorder %s20, 1
      %p151 = por %p149, %p150
      %p153 = scmp.ne.s32.totalorder %s138, %s152
      %p154 = scmp.eq.s32.totalorder %s20, 0
      %p155 = por %p153, %p154
      %s156 = ssub.s32 %s21, %s33
      %s157 = ssub.s32 %s22, %s29
      %s158 = sor.u32 %s156, %s157
      %p159 = scmp.eq.s32.totalorder %s158, 0
      %s161 = sadd.s32 %s160, 1
      %s162 = scalar_select %p159, %s160, %s161
      %p165 = pneg %p159
      %p166 = scmp.eq.s32.totalorder %s14, 1
      %p167 = por %p165, %p166
      %p168 = scmp.ne.s32.totalorder %s160, %s163
      %p169 = scmp.eq.s32.totalorder %s14, 0
      %p170 = por %p168, %p169
      %p171 = scmp.ne.s32.totalorder %s160, %s163
      %p172 = scmp.eq.s32.totalorder %s19, 1
      %p173 = por %p171, %p172
      %p174 = scmp.ne.s32.totalorder %s163, %s164
      %p175 = scmp.eq.s32.totalorder %s19, 0
      %p176 = por %p174, %p175
      %p177 = scmp.ne.s32.totalorder %s163, %s164
      %p178 = scmp.eq.s32.totalorder %s20, 1
      %p179 = por %p177, %p178
      %p181 = scmp.ne.s32.totalorder %s164, %s180
      %p182 = scmp.eq.s32.totalorder %s20, 0
      %p183 = por %p181, %p182
      %p184 = scmp.le.s32.totalorder 1, %s14
      %p185 = scmp.lt.s32.totalorder %s14, 3
      %p186 = pnand %p184, %p185
      %p187 = pneg %p186
      // Predicated region
      $region9: #{tpu_custom_call.1} parent=5 // pred_check
        _
      $region10: #{tpu_custom_call.1} parent=5 // pred_check_branch
        %189 = sbr.rel (%p186) target = $region12
      $region11: #{tpu_custom_call.1} parent=5 // pred_region
        %s190 = ssub.s32 %s14, 1
        // Predicated region
        $region13: #{tpu_custom_call.1} parent=11 // pred_check
          %p191 = pneg %p127
        $region14: #{tpu_custom_call.1} parent=11 // pred_check_branch
          %193 = sbr.rel (%p191) target = $region16
        $region15: #{tpu_custom_call.1} parent=11 // pred_region
          _
        $region16: #{tpu_custom_call.1} parent=11 // pred_fallthru
          _
        // Predicated region
        $region17: #{tpu_custom_call.1} parent=11 // pred_check
          %p194 = pneg %p148
        $region18: #{tpu_custom_call.1} parent=11 // pred_check_branch
          %196 = sbr.rel (%p194) target = $region20
        $region19: #{tpu_custom_call.1} parent=11 // pred_region
          _
        $region20: #{tpu_custom_call.1} parent=11 // pred_fallthru
          _
      $region12: #{tpu_custom_call.1} parent=5 // pred_fallthru
        _
      %p197 = scmp.lt.s32.totalorder %s14, 2
      // Predicated region
      $region21: #{tpu_custom_call.1} parent=5 // pred_check
        %p198 = pneg %p197
      $region22: #{tpu_custom_call.1} parent=5 // pred_check_branch
        %200 = sbr.rel (%p198) target = $region24
      $region23: #{tpu_custom_call.1} parent=5 // pred_region
        // Predicated region
        $region25: #{tpu_custom_call.1} parent=23 // pred_check
          %p201 = pneg %p46
        $region26: #{tpu_custom_call.1} parent=23 // pred_check_branch
          %203 = sbr.rel (%p201) target = $region28
        $region27: #{tpu_custom_call.1} parent=23 // pred_region
          %p204 = scmp.lt.s32.totalorder %s21, 1
          %s205 = scalar_select %p204, %s21, 1
          %s206 = smul.addr %s205, 3
          %s207 = smul.addr %s206, 4
          %s208 = scalar_lea.vmem %s0, %s207
        $region28: #{tpu_custom_call.1} parent=23 // pred_fallthru
          _
        // Predicated region
        $region29: #{tpu_custom_call.1} parent=23 // pred_check
          %p209 = pneg %p72
        $region30: #{tpu_custom_call.1} parent=23 // pred_check_branch
          %211 = sbr.rel (%p209) target = $region32
        $region31: #{tpu_custom_call.1} parent=23 // pred_region
          %p212 = scmp.lt.s32.totalorder %s21, 1
          %s213 = scalar_select %p212, %s21, 1
          %s214 = smul.addr %s213, 3
          %s215 = smul.addr %s214, 8
          %s216 = scalar_lea.vmem %s1, %s215
        $region32: #{tpu_custom_call.1} parent=23 // pred_fallthru
          _
        // Predicated region
        $region33: #{tpu_custom_call.1} parent=23 // pred_check
          %p217 = pneg %p100
        $region34: #{tpu_custom_call.1} parent=23 // pred_check_branch
          %219 = sbr.rel (%p217) target = $region36
        $region35: #{tpu_custom_call.1} parent=23 // pred_region
          %s220 = smul.u32 16, %s22
          %p221 = scmp.lt.s32.totalorder %s21, 1
          %s222 = scalar_select %p221, %s21, 1
          %p223 = scmp.lt.s32.totalorder %s220, 15
          %s224 = scalar_select %p223, %s220, 15
          %s225 = smul.addr %s222, 16
          %s226 = sadd.s32 %s224, %s225
          %s227 = smul.addr %s226, 8
          %s228 = scalar_lea.vmem %s2, %s227
          %s229 = smul.u32 16, %s22
        $region36: #{tpu_custom_call.1} parent=23 // pred_fallthru
          _
      $region24: #{tpu_custom_call.1} parent=5 // pred_fallthru
        _
      %p230 = scmp.le.s32.totalorder 1, %s14
      %p231 = scmp.lt.s32.totalorder %s14, 3
      %p232 = pnand %p230, %p231
      %p233 = pneg %p232
      // Predicated region
      $region37: #{tpu_custom_call.1} parent=5 // pred_check
        _
      $region38: #{tpu_custom_call.1} parent=5 // pred_check_branch
        %235 = sbr.rel (%p232) target = $region40
      $region39: #{tpu_custom_call.1} parent=5 // pred_region
        %s236 = ssub.s32 %s14, 1
        %p237 = scmp.lt.s32.totalorder %s23, 1
        %s238 = scalar_select %p237, %s23, 1
        %s239 = smul.addr %s238, 3
        %s240 = smul.addr %s239, 4
        %s241 = scalar_lea.vmem %s0, %s240
        %p242 = pneg %p52
        %p243 = pneg %p49
        %p244 = scmp.lt.s32.totalorder %s23, 1
        %s245 = scalar_select %p244, %s23, 1
        %s246 = smul.addr %s245, 3
        %s247 = smul.addr %s246, 8
        %s248 = scalar_lea.vmem %s1, %s247
        %p249 = pneg %p78
        %p250 = pneg %p75
        %s251 = smul.u32 16, %s24
        %p252 = scmp.lt.s32.totalorder %s23, 1
        %s253 = scalar_select %p252, %s23, 1
        %p254 = scmp.lt.s32.totalorder %s251, 15
        %s255 = scalar_select %p254, %s251, 15
        %s256 = smul.addr %s253, 16
        %s257 = sadd.s32 %s255, %s256
        %s258 = smul.addr %s257, 8
        %s259 = scalar_lea.vmem %s2, %s258
        %p260 = pneg %p106
        %p261 = pneg %p103
        %p262 = pneg %p127
        %p263 = pneg %p124
        %p264 = pneg %p148
        %p265 = pneg %p145
        %p266 = pneg %p176
        %p267 = pneg %p173
        %s268 = sand.u32 %s163, 1
        %s269 = scalar_lea.sflag [#allocation3], %s268
        %s270 = sand.u32 %s163, 1
        %s271 = smul.addr %s270, 24
        %s272 = scalar_lea.vmem [#allocation2], %s271
        %p273 = scmp.lt.s32.totalorder %s23, 1
        %s274 = scalar_select %p273, %s23, 1
        %s275 = smul.addr %s274, 3
        %s276 = smul.addr %s275, 4
        %s277 = scalar_lea.vmem %s0, %s276
        %p278 = scmp.lt.s32.totalorder %s23, 1
        %s279 = scalar_select %p278, %s23, 1
        %s280 = smul.addr %s279, 3
        %s281 = smul.addr %s280, 8
        %s282 = scalar_lea.vmem %s1, %s281
        %s283 = smul.u32 16, %s24
        %p284 = scmp.lt.s32.totalorder %s23, 1
        %s285 = scalar_select %p284, %s23, 1
        %p286 = scmp.lt.s32.totalorder %s283, 15
        %s287 = scalar_select %p286, %s283, 15
        %s288 = smul.addr %s285, 16
        %s289 = sadd.s32 %s287, %s288
        %s290 = smul.addr %s289, 8
        %s291 = scalar_lea.vmem %s2, %s290
        %s292 = smul.u32 16, %s24
        %v294 = vld [vmem:[%s291] sm:$0xff]
        %v295 = vld [vmem:[%s291 + $0x8] sm:$0xff]
        %v296 = vld [vmem:[%s291 + $0x10] sm:$0xff]
        %v297 = vld [vmem:[%s291 + $0x18] sm:$0xff]
        %v298 = vld [vmem:[%s291 + $0x20] sm:$0xff]
        %v299 = vld [vmem:[%s291 + $0x28] sm:$0xff]
        %v300 = vld [vmem:[%s291 + $0x30] sm:$0xff]
        %v301 = vld [vmem:[%s291 + $0x38] sm:$0xff]
        %v302 = vld [vmem:[%s291 + $0x40] sm:$0xff]
        %v303 = vld [vmem:[%s291 + $0x48] sm:$0xff]
        %v304 = vld [vmem:[%s291 + $0x50] sm:$0xff]
        %v305 = vld [vmem:[%s291 + $0x58] sm:$0xff]
        %v306 = vld [vmem:[%s291 + $0x60] sm:$0xff]
        %v307 = vld [vmem:[%s291 + $0x68] sm:$0xff]
        %v308 = vld [vmem:[%s291 + $0x70] sm:$0xff]
        %v309 = vld [vmem:[%s291 + $0x78] sm:$0xff]
        %v310 = vpack.c.bf16 %v295, %v294
        %v311 = vpack.c.bf16 %v297, %v296
        %v312 = vpack.c.bf16 %v299, %v298
        %v313 = vpack.c.bf16 %v301, %v300
        %v314 = vpack.c.bf16 %v303, %v302
        %v315 = vpack.c.bf16 %v305, %v304
        %v316 = vpack.c.bf16 %v307, %v306
        %v317 = vpack.c.bf16 %v309, %v308
        %v318 = vld [vmem:[%s3] sm:$0xf]
        %v319 = vld [vmem:[%s3 + $0x4] sm:$0xf]
        %v320 = vld [vmem:[%s3 + $0x8] sm:$0xf]
        %v321 = vld [vmem:[%s3 + $0xc] sm:$0xf]
        %v322 = vld [vmem:[%s4] sm:$0x1]
        %v324 = vperm.slane %v322, 0
        %v330 = vunpack.c.l.b16 %v318
        %v331 = vunpack.c.l.b16 %v319
        %v332 = vunpack.c.l.b16 %v320
        %v333 = vunpack.c.l.b16 %v321
        %v334 = vpack.c.b16 %v331, %v330
        %v335 = vpack.c.b16 %v333, %v332
        %vm338 = vcmask 261120
        %v340 = vsel %vm338, %v310, 0
        %v343 = vsel %vm338, %v311, 0
        %v346 = vsel %vm338, %v312, 0
        %v349 = vsel %vm338, %v313, 0
        %v352 = vsel %vm338, %v314, 0
        %v355 = vsel %vm338, %v315, 0
        %v358 = vsel %vm338, %v316, 0
        %v361 = vsel %vm338, %v317, 0
        %363 = vmatpush.bf16.msra.mxu0 0
        %364 = vmatpush.bf16.msra.mxu0 0
        %365 = vmatpush.bf16.msra.mxu0 0
        %366 = vmatpush.bf16.msra.mxu0 0
        %367 = vmatpush.bf16.msra.mxu0 0
        %368 = vmatpush.bf16.msra.mxu0 0
        %369 = vmatpush.bf16.msra.mxu0 %v335
        %370 = vmatpush.bf16.msra.mxu0 %v334
        %371 = vmatmul.bf16.gmra.mxu0 %v340
        %v372 = vpop.f32.mrf.mxu0
        %v373 = vadd.f32 %v324, %v372
        %v374 = vpop.f32.mrf.mxu0
        %v375 = vadd.f32 %v324, %v374
        %376 = vmatmul.bf16.gmra.mxu0 %v343
        %v377 = vpop.f32.mrf.mxu0
        %v378 = vadd.f32 %v324, %v377
        %v379 = vpop.f32.mrf.mxu0
        %v380 = vadd.f32 %v324, %v379
        %381 = vmatmul.bf16.gmra.mxu0 %v346
        %v382 = vpop.f32.mrf.mxu0
        %v383 = vadd.f32 %v324, %v382
        %v384 = vpop.f32.mrf.mxu0
        %v385 = vadd.f32 %v324, %v384
        %386 = vmatmul.bf16.gmra.mxu0 %v349
        %v387 = vpop.f32.mrf.mxu0
        %v388 = vadd.f32 %v324, %v387
        %v389 = vpop.f32.mrf.mxu0
        %v390 = vadd.f32 %v324, %v389
        %391 = vmatmul.bf16.gmra.mxu0 %v352
        %v392 = vpop.f32.mrf.mxu0
        %v393 = vadd.f32 %v324, %v392
        %v394 = vpop.f32.mrf.mxu0
        %v395 = vadd.f32 %v324, %v394
        %396 = vmatmul.bf16.gmra.mxu0 %v355
        %v397 = vpop.f32.mrf.mxu0
        %v398 = vadd.f32 %v324, %v397
        %v399 = vpop.f32.mrf.mxu0
        %v400 = vadd.f32 %v324, %v399
        %401 = vmatmul.bf16.gmra.mxu0 %v358
        %v402 = vpop.f32.mrf.mxu0
        %v403 = vadd.f32 %v324, %v402
        %v404 = vpop.f32.mrf.mxu0
        %v405 = vadd.f32 %v324, %v404
        %406 = vmatmul.bf16.gmra.mxu0 %v361
        %v407 = vpop.f32.mrf.mxu0
        %v408 = vadd.f32 %v324, %v407
        %v409 = vpop.f32.mrf.mxu0
        %v410 = vadd.f32 %v324, %v409
        %411 = vdwg.mxu0
        %v412 = vmul.f32 %v373, %v373
        %v413 = vmul.f32 %v375, %v375
        %v414 = vmul.f32 %v378, %v378
        %v415 = vmul.f32 %v380, %v380
        %v416 = vmul.f32 %v383, %v383
        %v417 = vmul.f32 %v385, %v385
        %v418 = vmul.f32 %v388, %v388
        %v419 = vmul.f32 %v390, %v390
        %v420 = vmul.f32 %v393, %v393
        %v421 = vmul.f32 %v395, %v395
        %v422 = vmul.f32 %v398, %v398
        %v423 = vmul.f32 %v400, %v400
        %v424 = vmul.f32 %v403, %v403
        %v425 = vmul.f32 %v405, %v405
        %v426 = vmul.f32 %v408, %v408
        %v427 = vmul.f32 %v410, %v410
        %v428 = vmul.f32 %v373, %v412
        %v429 = vmul.f32 %v375, %v413
        %v430 = vmul.f32 %v378, %v414
        %v431 = vmul.f32 %v380, %v415
        %v432 = vmul.f32 %v383, %v416
        %v433 = vmul.f32 %v385, %v417
        %v434 = vmul.f32 %v388, %v418
        %v435 = vmul.f32 %v390, %v419
        %v436 = vmul.f32 %v393, %v420
        %v437 = vmul.f32 %v395, %v421
        %v438 = vmul.f32 %v398, %v422
        %v439 = vmul.f32 %v400, %v423
        %v440 = vmul.f32 %v403, %v424
        %v441 = vmul.f32 %v405, %v425
        %v442 = vmul.f32 %v408, %v426
        %v443 = vmul.f32 %v410, %v427
        %v444 = vmul.f32 %v428, 0.044715
        %v445 = vmul.f32 %v429, 0.044715
        %v446 = vmul.f32 %v430, 0.044715
        %v447 = vmul.f32 %v431, 0.044715
        %v448 = vmul.f32 %v432, 0.044715
        %v449 = vmul.f32 %v433, 0.044715
        %v450 = vmul.f32 %v434, 0.044715
        %v451 = vmul.f32 %v435, 0.044715
        %v452 = vmul.f32 %v436, 0.044715
        %v453 = vmul.f32 %v437, 0.044715
        %v454 = vmul.f32 %v438, 0.044715
        %v455 = vmul.f32 %v439, 0.044715
        %v456 = vmul.f32 %v440, 0.044715
        %v457 = vmul.f32 %v441, 0.044715
        %v458 = vmul.f32 %v442, 0.044715
        %v459 = vmul.f32 %v443, 0.044715
        %v460 = vadd.f32 %v373, %v444
        %v461 = vadd.f32 %v375, %v445
        %v462 = vadd.f32 %v378, %v446
        %v463 = vadd.f32 %v380, %v447
        %v464 = vadd.f32 %v383, %v448
        %v465 = vadd.f32 %v385, %v449
        %v466 = vadd.f32 %v388, %v450
        %v467 = vadd.f32 %v390, %v451
        %v468 = vadd.f32 %v393, %v452
        %v469 = vadd.f32 %v395, %v453
        %v470 = vadd.f32 %v398, %v454
        %v471 = vadd.f32 %v400, %v455
        %v472 = vadd.f32 %v403, %v456
        %v473 = vadd.f32 %v405, %v457
        %v474 = vadd.f32 %v408, %v458
        %v475 = vadd.f32 %v410, %v459
        %v476 = vmul.f32 %v460, 0.7978846
        %v477 = vmul.f32 %v461, 0.7978846
        %v478 = vmul.f32 %v462, 0.7978846
        %v479 = vmul.f32 %v463, 0.7978846
        %v480 = vmul.f32 %v464, 0.7978846
        %v481 = vmul.f32 %v465, 0.7978846
        %v482 = vmul.f32 %v466, 0.7978846
        %v483 = vmul.f32 %v467, 0.7978846
        %v484 = vmul.f32 %v468, 0.7978846
        %v485 = vmul.f32 %v469, 0.7978846
        %v486 = vmul.f32 %v470, 0.7978846
        %v487 = vmul.f32 %v471, 0.7978846
        %v488 = vmul.f32 %v472, 0.7978846
        %v489 = vmul.f32 %v473, 0.7978846
        %v490 = vmul.f32 %v474, 0.7978846
        %v491 = vmul.f32 %v475, 0.7978846
        %v492 = vtanh.pop %v476
        %v493 = vtanh.pop %v477
        %v494 = vtanh.pop %v478
        %v495 = vtanh.pop %v479
        %v496 = vtanh.pop %v480
        %v497 = vtanh.pop %v481
        %v498 = vtanh.pop %v482
        %v499 = vtanh.pop %v483
        %v500 = vtanh.pop %v484
        %v501 = vtanh.pop %v485
        %v502 = vtanh.pop %v486
        %v503 = vtanh.pop %v487
        %v504 = vtanh.pop %v488
        %v505 = vtanh.pop %v489
        %v506 = vtanh.pop %v490
        %v507 = vtanh.pop %v491
        %v508 = vadd.f32 %v492, 1.0
        %v509 = vadd.f32 %v493, 1.0
        %v510 = vadd.f32 %v494, 1.0
        %v511 = vadd.f32 %v495, 1.0
        %v512 = vadd.f32 %v496, 1.0
        %v513 = vadd.f32 %v497, 1.0
        %v514 = vadd.f32 %v498, 1.0
        %v515 = vadd.f32 %v499, 1.0
        %v516 = vadd.f32 %v500, 1.0
        %v517 = vadd.f32 %v501, 1.0
        %v518 = vadd.f32 %v502, 1.0
        %v519 = vadd.f32 %v503, 1.0
        %v520 = vadd.f32 %v504, 1.0
        %v521 = vadd.f32 %v505, 1.0
        %v522 = vadd.f32 %v506, 1.0
        %v523 = vadd.f32 %v507, 1.0
        %v524 = vmul.f32 %v508, 0.5
        %v525 = vmul.f32 %v509, 0.5
        %v526 = vmul.f32 %v510, 0.5
        %v527 = vmul.f32 %v511, 0.5
        %v528 = vmul.f32 %v512, 0.5
        %v529 = vmul.f32 %v513, 0.5
        %v530 = vmul.f32 %v514, 0.5
        %v531 = vmul.f32 %v515, 0.5
        %v532 = vmul.f32 %v516, 0.5
        %v533 = vmul.f32 %v517, 0.5
        %v534 = vmul.f32 %v518, 0.5
        %v535 = vmul.f32 %v519, 0.5
        %v536 = vmul.f32 %v520, 0.5
        %v537 = vmul.f32 %v521, 0.5
        %v538 = vmul.f32 %v522, 0.5
        %v539 = vmul.f32 %v523, 0.5
        %v540 = vmul.f32 %v373, %v524
        %v541 = vmul.f32 %v375, %v525
        %v542 = vmul.f32 %v378, %v526
        %v543 = vmul.f32 %v380, %v527
        %v544 = vmul.f32 %v383, %v528
        %v545 = vmul.f32 %v385, %v529
        %v546 = vmul.f32 %v388, %v530
        %v547 = vmul.f32 %v390, %v531
        %v548 = vmul.f32 %v393, %v532
        %v549 = vmul.f32 %v395, %v533
        %v550 = vmul.f32 %v398, %v534
        %v551 = vmul.f32 %v400, %v535
        %v552 = vmul.f32 %v403, %v536
        %v553 = vmul.f32 %v405, %v537
        %v554 = vmul.f32 %v408, %v538
        %v555 = vmul.f32 %v410, %v539
        %v556 = vsel %vm338, %v540, 0.0
        %557 = vadd.xlane.f32.xlu0 %v556
        %v558 = vpop.xlane.xlu0 %557
        %v559 = vsel %vm338, %v541, 0.0
        %560 = vadd.xlane.f32.xlu0 %v559
        %v561 = vpop.xlane.xlu0 %560
        %v562 = vsel %vm338, %v542, 0.0
        %563 = vadd.xlane.f32.xlu0 %v562
        %v564 = vpop.xlane.xlu0 %563
        %v565 = vsel %vm338, %v543, 0.0
        %566 = vadd.xlane.f32.xlu0 %v565
        %v567 = vpop.xlane.xlu0 %566
        %v568 = vsel %vm338, %v544, 0.0
        %569 = vadd.xlane.f32.xlu0 %v568
        %v570 = vpop.xlane.xlu0 %569
        %v571 = vsel %vm338, %v545, 0.0
        %572 = vadd.xlane.f32.xlu0 %v571
        %v573 = vpop.xlane.xlu0 %572
        %v574 = vsel %vm338, %v546, 0.0
        %575 = vadd.xlane.f32.xlu0 %v574
        %v576 = vpop.xlane.xlu0 %575
        %v577 = vsel %vm338, %v547, 0.0
        %578 = vadd.xlane.f32.xlu0 %v577
        %v579 = vpop.xlane.xlu0 %578
        %v580 = vsel %vm338, %v548, 0.0
        %581 = vadd.xlane.f32.xlu0 %v580
        %v582 = vpop.xlane.xlu0 %581
        %v583 = vsel %vm338, %v549, 0.0
        %584 = vadd.xlane.f32.xlu0 %v583
        %v585 = vpop.xlane.xlu0 %584
        %v586 = vsel %vm338, %v550, 0.0
        %587 = vadd.xlane.f32.xlu0 %v586
        %v588 = vpop.xlane.xlu0 %587
        %v589 = vsel %vm338, %v551, 0.0
        %590 = vadd.xlane.f32.xlu0 %v589
        %v591 = vpop.xlane.xlu0 %590
        %v592 = vsel %vm338, %v552, 0.0
        %593 = vadd.xlane.f32.xlu0 %v592
        %v594 = vpop.xlane.xlu0 %593
        %v595 = vsel %vm338, %v553, 0.0
        %596 = vadd.xlane.f32.xlu0 %v595
        %v597 = vpop.xlane.xlu0 %596
        %v598 = vsel %vm338, %v554, 0.0
        %599 = vadd.xlane.f32.xlu0 %v598
        %v600 = vpop.xlane.xlu0 %599
        %v601 = vsel %vm338, %v555, 0.0
        %602 = vadd.xlane.f32.xlu0 %v601
        %v603 = vpop.xlane.xlu0 %602
        %v604 = vrcp.pop 32.0
        %v605 = vmul.f32 32.0, %v604
        %v606 = vsub.f32 1.0, %v605
        %v607 = vmul.f32 %v604, %v606
        %v608 = vadd.f32 %v604, %v607
        %vm609 = vweird.f32 %v604
        %v610 = vsel %vm609, %v604, %v608
        %v611 = vmul.f32 %v558, %v610
        %v612 = vmul.f32 %v561, %v610
        %v613 = vmul.f32 %v564, %v610
        %v614 = vmul.f32 %v567, %v610
        %v615 = vmul.f32 %v570, %v610
        %v616 = vmul.f32 %v573, %v610
        %v617 = vmul.f32 %v576, %v610
        %v618 = vmul.f32 %v579, %v610
        %v619 = vmul.f32 %v582, %v610
        %v620 = vmul.f32 %v585, %v610
        %v621 = vmul.f32 %v588, %v610
        %v622 = vmul.f32 %v591, %v610
        %v623 = vmul.f32 %v594, %v610
        %v624 = vmul.f32 %v597, %v610
        %v625 = vmul.f32 %v600, %v610
        %v626 = vmul.f32 %v603, %v610
        %v627 = vsub.f32 %v540, %v611
        %v628 = vsub.f32 %v541, %v612
        %v629 = vsub.f32 %v542, %v613
        %v630 = vsub.f32 %v543, %v614
        %v631 = vsub.f32 %v544, %v615
        %v632 = vsub.f32 %v545, %v616
        %v633 = vsub.f32 %v546, %v617
        %v634 = vsub.f32 %v547, %v618
        %v635 = vsub.f32 %v548, %v619
        %v636 = vsub.f32 %v549, %v620
        %v637 = vsub.f32 %v550, %v621
        %v638 = vsub.f32 %v551, %v622
        %v639 = vsub.f32 %v552, %v623
        %v640 = vsub.f32 %v553, %v624
        %v641 = vsub.f32 %v554, %v625
        %v642 = vsub.f32 %v555, %v626
        %v643 = vmul.f32 %v627, %v627
        %v644 = vmul.f32 %v628, %v628
        %v645 = vmul.f32 %v629, %v629
        %v646 = vmul.f32 %v630, %v630
        %v647 = vmul.f32 %v631, %v631
        %v648 = vmul.f32 %v632, %v632
        %v649 = vmul.f32 %v633, %v633
        %v650 = vmul.f32 %v634, %v634
        %v651 = vmul.f32 %v635, %v635
        %v652 = vmul.f32 %v636, %v636
        %v653 = vmul.f32 %v637, %v637
        %v654 = vmul.f32 %v638, %v638
        %v655 = vmul.f32 %v639, %v639
        %v656 = vmul.f32 %v640, %v640
        %v657 = vmul.f32 %v641, %v641
        %v658 = vmul.f32 %v642, %v642
        %v659 = vsel %vm338, %v643, 0.0
        %660 = vadd.xlane.f32.xlu0 %v659
        %v661 = vpop.xlane.xlu0 %660
        %v662 = vsel %vm338, %v644, 0.0
        %663 = vadd.xlane.f32.xlu0 %v662
        %v664 = vpop.xlane.xlu0 %663
        %v665 = vsel %vm338, %v645, 0.0
        %666 = vadd.xlane.f32.xlu0 %v665
        %v667 = vpop.xlane.xlu0 %666
        %v668 = vsel %vm338, %v646, 0.0
        %669 = vadd.xlane.f32.xlu0 %v668
        %v670 = vpop.xlane.xlu0 %669
        %v671 = vsel %vm338, %v647, 0.0
        %672 = vadd.xlane.f32.xlu0 %v671
        %v673 = vpop.xlane.xlu0 %672
        %v674 = vsel %vm338, %v648, 0.0
        %675 = vadd.xlane.f32.xlu0 %v674
        %v676 = vpop.xlane.xlu0 %675
        %v677 = vsel %vm338, %v649, 0.0
        %678 = vadd.xlane.f32.xlu0 %v677
        %v679 = vpop.xlane.xlu0 %678
        %v680 = vsel %vm338, %v650, 0.0
        %681 = vadd.xlane.f32.xlu0 %v680
        %v682 = vpop.xlane.xlu0 %681
        %v683 = vsel %vm338, %v651, 0.0
        %684 = vadd.xlane.f32.xlu0 %v683
        %v685 = vpop.xlane.xlu0 %684
        %v686 = vsel %vm338, %v652, 0.0
        %687 = vadd.xlane.f32.xlu0 %v686
        %v688 = vpop.xlane.xlu0 %687
        %v689 = vsel %vm338, %v653, 0.0
        %690 = vadd.xlane.f32.xlu0 %v689
        %v691 = vpop.xlane.xlu0 %690
        %v692 = vsel %vm338, %v654, 0.0
        %693 = vadd.xlane.f32.xlu0 %v692
        %v694 = vpop.xlane.xlu0 %693
        %v695 = vsel %vm338, %v655, 0.0
        %696 = vadd.xlane.f32.xlu0 %v695
        %v697 = vpop.xlane.xlu0 %696
        %v698 = vsel %vm338, %v656, 0.0
        %699 = vadd.xlane.f32.xlu0 %v698
        %v700 = vpop.xlane.xlu0 %699
        %v701 = vsel %vm338, %v657, 0.0
        %702 = vadd.xlane.f32.xlu0 %v701
        %v703 = vpop.xlane.xlu0 %702
        %v704 = vsel %vm338, %v658, 0.0
        %705 = vadd.xlane.f32.xlu0 %v704
        %v706 = vpop.xlane.xlu0 %705
        %v707 = vmul.f32 %v661, %v610
        %v708 = vmul.f32 %v664, %v610
        %v709 = vmul.f32 %v667, %v610
        %v710 = vmul.f32 %v670, %v610
        %v711 = vmul.f32 %v673, %v610
        %v712 = vmul.f32 %v676, %v610
        %v713 = vmul.f32 %v679, %v610
        %v714 = vmul.f32 %v682, %v610
        %v715 = vmul.f32 %v685, %v610
        %v716 = vmul.f32 %v688, %v610
        %v717 = vmul.f32 %v691, %v610
        %v718 = vmul.f32 %v694, %v610
        %v719 = vmul.f32 %v697, %v610
        %v720 = vmul.f32 %v700, %v610
        %v721 = vmul.f32 %v703, %v610
        %v722 = vmul.f32 %v706, %v610
        %v723 = vadd.f32 %v707, 1e-05
        %v724 = vadd.f32 %v708, 1e-05
        %v725 = vadd.f32 %v709, 1e-05
        %v726 = vadd.f32 %v710, 1e-05
        %v727 = vadd.f32 %v711, 1e-05
        %v728 = vadd.f32 %v712, 1e-05
        %v729 = vadd.f32 %v713, 1e-05
        %v730 = vadd.f32 %v714, 1e-05
        %v731 = vadd.f32 %v715, 1e-05
        %v732 = vadd.f32 %v716, 1e-05
        %v733 = vadd.f32 %v717, 1e-05
        %v734 = vadd.f32 %v718, 1e-05
        %v735 = vadd.f32 %v719, 1e-05
        %v736 = vadd.f32 %v720, 1e-05
        %v737 = vadd.f32 %v721, 1e-05
        %v738 = vadd.f32 %v722, 1e-05
        %v739 = vrsqrt.pop %v723
        %v740 = vmul.f32 %v739, %v723
        %v741 = vmul.f32 %v740, %v739
        %v742 = vmul.f32 0.5, %v741
        %v743 = vsub.f32 1.5, %v742
        %v744 = vmul.f32 %v739, %v743
        %vm745 = vweird.f32 %v723
        %vm746 = vweird.f32 %v739
        %vm747 = vmor %vm745, %vm746
        %v748 = vsel %vm747, %v739, %v744
        %v749 = vrsqrt.pop %v724
        %v750 = vmul.f32 %v749, %v724
        %v751 = vmul.f32 %v750, %v749
        %v752 = vmul.f32 0.5, %v751
        %v753 = vsub.f32 1.5, %v752
        %v754 = vmul.f32 %v749, %v753
        %vm755 = vweird.f32 %v724
        %vm756 = vweird.f32 %v749
        %vm757 = vmor %vm755, %vm756
        %v758 = vsel %vm757, %v749, %v754
        %v759 = vrsqrt.pop %v725
        %v760 = vmul.f32 %v759, %v725
        %v761 = vmul.f32 %v760, %v759
        %v762 = vmul.f32 0.5, %v761
        %v763 = vsub.f32 1.5, %v762
        %v764 = vmul.f32 %v759, %v763
        %vm765 = vweird.f32 %v725
        %vm766 = vweird.f32 %v759
        %vm767 = vmor %vm765, %vm766
        %v768 = vsel %vm767, %v759, %v764
        %v769 = vrsqrt.pop %v726
        %v770 = vmul.f32 %v769, %v726
        %v771 = vmul.f32 %v770, %v769
        %v772 = vmul.f32 0.5, %v771
        %v773 = vsub.f32 1.5, %v772
        %v774 = vmul.f32 %v769, %v773
        %vm775 = vweird.f32 %v726
        %vm776 = vweird.f32 %v769
        %vm777 = vmor %vm775, %vm776
        %v778 = vsel %vm777, %v769, %v774
        %v779 = vrsqrt.pop %v727
        %v780 = vmul.f32 %v779, %v727
        %v781 = vmul.f32 %v780, %v779
        %v782 = vmul.f32 0.5, %v781
        %v783 = vsub.f32 1.5, %v782
        %v784 = vmul.f32 %v779, %v783
        %vm785 = vweird.f32 %v727
        %vm786 = vweird.f32 %v779
        %vm787 = vmor %vm785, %vm786
        %v788 = vsel %vm787, %v779, %v784
        %v789 = vrsqrt.pop %v728
        %v790 = vmul.f32 %v789, %v728
        %v791 = vmul.f32 %v790, %v789
        %v792 = vmul.f32 0.5, %v791
        %v793 = vsub.f32 1.5, %v792
        %v794 = vmul.f32 %v789, %v793
        %vm795 = vweird.f32 %v728
        %vm796 = vweird.f32 %v789
        %vm797 = vmor %vm795, %vm796
        %v798 = vsel %vm797, %v789, %v794
        %v799 = vrsqrt.pop %v729
        %v800 = vmul.f32 %v799, %v729
        %v801 = vmul.f32 %v800, %v799
        %v802 = vmul.f32 0.5, %v801
        %v803 = vsub.f32 1.5, %v802
        %v804 = vmul.f32 %v799, %v803
        %vm805 = vweird.f32 %v729
        %vm806 = vweird.f32 %v799
        %vm807 = vmor %vm805, %vm806
        %v808 = vsel %vm807, %v799, %v804
        %v809 = vrsqrt.pop %v730
        %v810 = vmul.f32 %v809, %v730
        %v811 = vmul.f32 %v810, %v809
        %v812 = vmul.f32 0.5, %v811
        %v813 = vsub.f32 1.5, %v812
        %v814 = vmul.f32 %v809, %v813
        %vm815 = vweird.f32 %v730
        %vm816 = vweird.f32 %v809
        %vm817 = vmor %vm815, %vm816
        %v818 = vsel %vm817, %v809, %v814
        %v819 = vrsqrt.pop %v731
        %v820 = vmul.f32 %v819, %v731
        %v821 = vmul.f32 %v820, %v819
        %v822 = vmul.f32 0.5, %v821
        %v823 = vsub.f32 1.5, %v822
        %v824 = vmul.f32 %v819, %v823
        %vm825 = vweird.f32 %v731
        %vm826 = vweird.f32 %v819
        %vm827 = vmor %vm825, %vm826
        %v828 = vsel %vm827, %v819, %v824
        %v829 = vrsqrt.pop %v732
        %v830 = vmul.f32 %v829, %v732
        %v831 = vmul.f32 %v830, %v829
        %v832 = vmul.f32 0.5, %v831
        %v833 = vsub.f32 1.5, %v832
        %v834 = vmul.f32 %v829, %v833
        %vm835 = vweird.f32 %v732
        %vm836 = vweird.f32 %v829
        %vm837 = vmor %vm835, %vm836
        %v838 = vsel %vm837, %v829, %v834
        %v839 = vrsqrt.pop %v733
        %v840 = vmul.f32 %v839, %v733
        %v841 = vmul.f32 %v840, %v839
        %v842 = vmul.f32 0.5, %v841
        %v843 = vsub.f32 1.5, %v842
        %v844 = vmul.f32 %v839, %v843
        %vm845 = vweird.f32 %v733
        %vm846 = vweird.f32 %v839
        %vm847 = vmor %vm845, %vm846
        %v848 = vsel %vm847, %v839, %v844
        %v849 = vrsqrt.pop %v734
        %v850 = vmul.f32 %v849, %v734
        %v851 = vmul.f32 %v850, %v849
        %v852 = vmul.f32 0.5, %v851
        %v853 = vsub.f32 1.5, %v852
        %v854 = vmul.f32 %v849, %v853
        %vm855 = vweird.f32 %v734
        %vm856 = vweird.f32 %v849
        %vm857 = vmor %vm855, %vm856
        %v858 = vsel %vm857, %v849, %v854
        %v859 = vrsqrt.pop %v735
        %v860 = vmul.f32 %v859, %v735
        %v861 = vmul.f32 %v860, %v859
        %v862 = vmul.f32 0.5, %v861
        %v863 = vsub.f32 1.5, %v862
        %v864 = vmul.f32 %v859, %v863
        %vm865 = vweird.f32 %v735
        %vm866 = vweird.f32 %v859
        %vm867 = vmor %vm865, %vm866
        %v868 = vsel %vm867, %v859, %v864
        %v869 = vrsqrt.pop %v736
        %v870 = vmul.f32 %v869, %v736
        %v871 = vmul.f32 %v870, %v869
        %v872 = vmul.f32 0.5, %v871
        %v873 = vsub.f32 1.5, %v872
        %v874 = vmul.f32 %v869, %v873
        %vm875 = vweird.f32 %v736
        %vm876 = vweird.f32 %v869
        %vm877 = vmor %vm875, %vm876
        %v878 = vsel %vm877, %v869, %v874
        %v879 = vrsqrt.pop %v737
        %v880 = vmul.f32 %v879, %v737
        %v881 = vmul.f32 %v880, %v879
        %v882 = vmul.f32 0.5, %v881
        %v883 = vsub.f32 1.5, %v882
        %v884 = vmul.f32 %v879, %v883
        %vm885 = vweird.f32 %v737
        %vm886 = vweird.f32 %v879
        %vm887 = vmor %vm885, %vm886
        %v888 = vsel %vm887, %v879, %v884
        %v889 = vrsqrt.pop %v738
        %v890 = vmul.f32 %v889, %v738
        %v891 = vmul.f32 %v890, %v889
        %v892 = vmul.f32 0.5, %v891
        %v893 = vsub.f32 1.5, %v892
        %v894 = vmul.f32 %v889, %v893
        %vm895 = vweird.f32 %v738
        %vm896 = vweird.f32 %v889
        %vm897 = vmor %vm895, %vm896
        %v898 = vsel %vm897, %v889, %v894
        %v899 = vmul.f32 %v627, %v748
        %v900 = vmul.f32 %v628, %v758
        %v901 = vmul.f32 %v629, %v768
        %v902 = vmul.f32 %v630, %v778
        %v903 = vmul.f32 %v631, %v788
        %v904 = vmul.f32 %v632, %v798
        %v905 = vmul.f32 %v633, %v808
        %v906 = vmul.f32 %v634, %v818
        %v907 = vmul.f32 %v635, %v828
        %v908 = vmul.f32 %v636, %v838
        %v909 = vmul.f32 %v637, %v848
        %v910 = vmul.f32 %v638, %v858
        %v911 = vmul.f32 %v639, %v868
        %v912 = vmul.f32 %v640, %v878
        %v913 = vmul.f32 %v641, %v888
        %v914 = vmul.f32 %v642, %v898
        %v915 = vld [vmem:[%s277] sm:$0xf]
        %v916 = vld [vmem:[%s277 + $0x4] sm:$0xf]
        %v917 = vld [vmem:[%s277 + $0x8] sm:$0xf]
        %v918 = vpack.c.bf16 %v900, %v899
        %v919 = vpack.c.bf16 %v902, %v901
        %v920 = vpack.c.bf16 %v904, %v903
        %v921 = vpack.c.bf16 %v906, %v905
        %v922 = vpack.c.bf16 %v908, %v907
        %v923 = vpack.c.bf16 %v910, %v909
        %v924 = vpack.c.bf16 %v912, %v911
        %v925 = vpack.c.bf16 %v914, %v913
        %v926 = vld [vmem:[%s282] sm:$0xff]
        %v927 = vld [vmem:[%s282 + $0x8] sm:$0xff]
        %v928 = vld [vmem:[%s282 + $0x10] sm:$0xff]
        %930 = vset.pattern.permute.xlu0 0
        %931 = vperm.xlu0 %930, %v926
        %v932 = vpop.permute.xlu0 %931
        %935 = vset.pattern.permute.xlu0 0
        %936 = vperm.xlu0 %935, %v927
        %v937 = vpop.permute.xlu0 %936
        %940 = vset.pattern.permute.xlu0 0
        %941 = vperm.xlu0 %940, %v928
        %v942 = vpop.permute.xlu0 %941
        %v947 = vunpack.c.l.b16 %v915
        %v948 = vunpack.c.l.b16 %v916
        %v949 = vunpack.c.l.b16 %v917
        %v950 = vpack.c.b16 %v948, %v947
        %v951 = vpack.c.b16 %v949, %v949
        %v953 = vsel %vm338, %v950, 0
        %v956 = vsel %vm338, %v951, 0
        %v959 = vsel %vm338, %v918, 0
        %v962 = vsel %vm338, %v919, 0
        %v965 = vsel %vm338, %v920, 0
        %v968 = vsel %vm338, %v921, 0
        %v971 = vsel %vm338, %v922, 0
        %v974 = vsel %vm338, %v923, 0
        %v977 = vsel %vm338, %v924, 0
        %v980 = vsel %vm338, %v925, 0
        %982 = vmatpush.bf16.xpose.msra.mxu0 %v980
        %983 = vmatpush.bf16.xpose.msra.mxu0 %v977
        %984 = vmatpush.bf16.xpose.msra.mxu0 %v974
        %985 = vmatpush.bf16.xpose.msra.mxu0 %v971
        %986 = vmatpush.bf16.xpose.msra.mxu0 %v968
        %987 = vmatpush.bf16.xpose.msra.mxu0 %v965
        %988 = vmatpush.bf16.xpose.msra.mxu0 %v962
        %989 = vmatpush.bf16.xpose.msra.mxu0 %v959
        %990 = vmatmul.bf16.gmra.mxu0 %v953
        %v991 = vpop.f32.mrf.mxu0
        %v992 = vadd.f32 %v932, %v991
        %v993 = vpop.f32.mrf.mxu0
        %v994 = vadd.f32 %v937, %v993
        %995 = vmatmul.bf16.gmra.mxu0 %v956
        %v996 = vpop.f32.mrf.mxu0
        %v997 = vadd.f32 %v942, %v996
        %v998 = vpop.f32.mrf.mxu0
        %999 = vdwg.mxu0
        %1000 = vst [vmem:[%s272] sm:$0xff] %v992
        %1001 = vst [vmem:[%s272 + $0x8] sm:$0xff] %v994
        %1002 = vst [vmem:[%s272 + $0x10] sm:$0xff] %v997
        %s1003 = sand.u32 %s163, 1
        %s1004 = scalar_lea.sflag [#allocation3], %s1003
        %s1005 = sand.u32 %s163, 1
        %s1006 = smul.addr %s1005, 24
        %s1007 = scalar_lea.vmem [#allocation2], %s1006
        // Predicated region
        $region41: #{tpu_custom_call.1} parent=39 // pred_check
          %p1008 = pneg %p173
        $region42: #{tpu_custom_call.1} parent=39 // pred_check_branch
          %1010 = sbr.rel (%p1008) target = $region44
        $region43: #{tpu_custom_call.1} parent=39 // pred_region
          %1012 = vsyncadd %s1004, 0
          %s1013 = smul.addr %s23, 3
          %s1014 = sadd.s32 %s24, %s1013
          %s1015 = smul.addr %s1014, 8
          %s1016 = scalar_lea.hbm %s5, %s1015
          %s1017 = sshll.u32 %s1007, 4
          %s1018 = int_to_ptr.vmem [resolvable:$true] %s1017
          %s1019 = sshll.u32 %s1016, 4
          %s1020 = int_to_ptr.hbm [resolvable:$true] %s1019
          %1025 = dma.vmem_to_hbm [thread:$0]  %s1018, 384, %s1020, %s1004, 128, 128, 8
        $region44: #{tpu_custom_call.1} parent=39 // pred_fallthru
          _
      $region40: #{tpu_custom_call.1} parent=5 // pred_fallthru
        _
      %p1026 = scmp.le.s32.totalorder 2, %s14
      // Predicated region
      $region45: #{tpu_custom_call.1} parent=5 // pred_check
        %p1027 = pneg %p1026
      $region46: #{tpu_custom_call.1} parent=5 // pred_check_branch
        %1029 = sbr.rel (%p1027) target = $region48
      $region47: #{tpu_custom_call.1} parent=5 // pred_region
        %s1030 = ssub.s32 %s14, 2
        // Predicated region
        $region49: #{tpu_custom_call.1} parent=47 // pred_check
          %p1031 = pneg %p179
        $region50: #{tpu_custom_call.1} parent=47 // pred_check_branch
          %1033 = sbr.rel (%p1031) target = $region52
        $region51: #{tpu_custom_call.1} parent=47 // pred_region
          %s1034 = sand.u32 %s164, 1
          %s1035 = scalar_lea.sflag [#allocation3], %s1034
          %s1036 = sand.u32 %s164, 1
          %s1037 = smul.addr %s1036, 24
          %s1038 = scalar_lea.vmem [#allocation2], %s1037
          %1040 = dma.done %s1035, 384
        $region52: #{tpu_custom_call.1} parent=47 // pred_fallthru
          _
      $region48: #{tpu_custom_call.1} parent=5 // pred_fallthru
        _
    $region6: #{tpu_custom_call.1} parent=1 // loop_footer
      %s18 = sadd.s32 1, %s14
    $region7: #{tpu_custom_call.1} parent=1 // loop_footer_branch
      %13 = sbr.rel target = $region3
    $region8: #{tpu_custom_call.1} parent=1 // loop_exit
      _
    %1041 = vsyncpa [#allocation3], 1
    %s1042 = scalar_lea.sflag [#allocation3], 1
    %1043 = vsyncpa %s1042, 1

</llo_original>
